<compile_context>
chip_gen: v7x
topology: tpu7x:2x2x1
jax: 0.10.0
libtpu: 0.0.40
codegen_flags: <defaults>
</compile_context>

<pallas_src>
import functools

import jax
import jax.numpy as jnp
from jax.experimental import pallas as pl
from jax.experimental.pallas import tpu as pltpu

IN_FEATURES = 28 * 28   # 784
OUT_FEATURES = 10
K_PAD = 896             # 7 * 128  (lane-aligned contraction dim)
N_PAD = 128             # one full lane width (lane-dense output)


def _round_up(x, m):
    return (x + m - 1) // m * m


def linear_kernel(x_ref, w_ref, b_ref, o_ref):
    # x_ref: (TB, K_PAD) bf16, w_ref: (K_PAD, N_PAD) bf16,
    # b_ref: (1, N_PAD) f32,   o_ref: (TB, N_PAD) f32
    acc = jnp.dot(x_ref[...], w_ref[...], preferred_element_type=jnp.float32)
    o_ref[...] = (acc + b_ref[...]).astype(o_ref.dtype)   # f32 epilogue


@functools.partial(jax.jit, static_argnames=("block_b",))
def deepnet_forward(x, w, b, *, block_b=256):
    """x: (B, 784) f32, w: (10, 784) f32 (PyTorch nn.Linear layout), b: (10,) f32 -> (B, 10) f32."""
    B, K = x.shape
    N, K2 = w.shape
    assert K == K2 == IN_FEATURES and N == OUT_FEATURES

    # Batch tile: multiple of 8 sublanes; never larger than the (padded) batch.
    tb = min(block_b, _round_up(B, 8))
    b_padded = _round_up(B, tb)

    # Pad to MXU/lane-friendly shapes; cast matmul operands to bf16 (f32 accum).
    x_p = jnp.pad(x, ((0, b_padded - B), (0, K_PAD - K))).astype(jnp.bfloat16)
    w_p = jnp.pad(w.T, ((0, K_PAD - K), (0, N_PAD - N))).astype(jnp.bfloat16)
    bias_p = jnp.pad(b, (0, N_PAD - N)).reshape(1, N_PAD).astype(jnp.float32)

    out = pl.pallas_call(
        linear_kernel,
        out_shape=jax.ShapeDtypeStruct((b_padded, N_PAD), jnp.float32),
        grid=(b_padded // tb,),
        in_specs=[
            pl.BlockSpec((tb, K_PAD), lambda i: (i, 0)),     # batch-tiled activations
            pl.BlockSpec((K_PAD, N_PAD), lambda i: (0, 0)),  # weights: constant block, loaded once
            pl.BlockSpec((1, N_PAD), lambda i: (0, 0)),      # bias:    constant block, loaded once
        ],
        out_specs=pl.BlockSpec((tb, N_PAD), lambda i: (i, 0)),
        compiler_params=pltpu.CompilerParams(
            dimension_semantics=("parallel",),  # shards batch axis across v7x's 2 TCs
        ),
    )(x_p, w_p, bias_p)

    return out[:B, :N]


if __name__ == "__main__":
    key = jax.random.PRNGKey(0)
    k_x, k_w, k_b = jax.random.split(key, 3)

    B = 512  # realistic MNIST-ish batch -> grid=(2,) with TB=256
    x = jax.random.normal(k_x, (B, IN_FEATURES), dtype=jnp.float32)
    w = jax.random.normal(k_w, (OUT_FEATURES, IN_FEATURES), dtype=jnp.float32) * 0.05
    b = jax.random.normal(k_b, (OUT_FEATURES,), dtype=jnp.float32) * 0.05

    out = jax.block_until_ready(deepnet_forward(x, w, b))
    assert out.shape == (B, OUT_FEATURES)

    # Reference with the same bf16 operand rounding (MXU accumulates in f32).
    x_bf = x.astype(jnp.bfloat16).astype(jnp.float32)
    w_bf = w.astype(jnp.bfloat16).astype(jnp.float32)
    ref_bf = x_bf @ w_bf.T + b
    assert jnp.allclose(out, ref_bf, atol=2e-3, rtol=2e-3)

    # Sanity vs. full-f32 reference (tolerance covers bf16 operand rounding).
    ref_f32 = x @ w.T + b
    assert jnp.allclose(out, ref_f32, atol=5e-2, rtol=5e-2)

    print("KERNEL_OK")
</pallas_src>

<mosaic_0001>
module attributes {stable_mosaic.version = 11 : i64} {
  func.func @linear_kernel(%arg0: i32, %arg1: memref<256x896xbf16, #tpu.memory_space<vmem>>, %arg2: memref<896x128xbf16, #tpu.memory_space<vmem>>, %arg3: memref<1x128xf32, #tpu.memory_space<vmem>>, %arg4: memref<256x128xf32, #tpu.memory_space<vmem>>) attributes {dimension_semantics = [#tpu.dimension_semantics<parallel>], iteration_bounds = array<i64: 2>, scalar_prefetch = 0 : i64, scratch_operands = 0 : i64, tpu.core_type = #tpu.core_type<tc>, window_params = [{transform_indices = @transform_0, window_bounds = array<i64: 256, 896>}, {pipeline_mode = #tpu.pipeline_mode<synchronous>, transform_indices = @transform_1, window_bounds = array<i64: 896, 128>}, {pipeline_mode = #tpu.pipeline_mode<synchronous>, transform_indices = @transform_2, window_bounds = array<i64: 1, 128>}, {transform_indices = @transform_3, window_bounds = array<i64: 256, 128>}]} {
    %c0 = arith.constant 0 : index
    %c0_0 = arith.constant 0 : index
    %0 = vector.load %arg1[%c0, %c0_0] : memref<256x896xbf16, #tpu.memory_space<vmem>>, vector<256x896xbf16>
    %c0_1 = arith.constant 0 : index
    %c0_2 = arith.constant 0 : index
    %1 = vector.load %arg2[%c0_1, %c0_2] : memref<896x128xbf16, #tpu.memory_space<vmem>>, vector<896x128xbf16>
    %cst = arith.constant dense<0.000000e+00> : vector<256x128xf32>
    %2 = tpu.matmul %0, %1, %cst {dimension_numbers = #tpu.dot_dimension_numbers<[1], [0], [0], [1], [0, 0, 1, 1], [], []>} : vector<256x896xbf16>, vector<896x128xbf16>, vector<256x128xf32> -> vector<256x128xf32>
    %c0_3 = arith.constant 0 : index
    %c0_4 = arith.constant 0 : index
    %3 = vector.load %arg3[%c0_3, %c0_4] : memref<1x128xf32, #tpu.memory_space<vmem>>, vector<1x128xf32>
    %4 = vector.broadcast %3 : vector<1x128xf32> to vector<256x128xf32>
    %5 = arith.addf %2, %4 : vector<256x128xf32>
    %c0_5 = arith.constant 0 : index
    %c0_6 = arith.constant 0 : index
    %6 = vector.load %arg4[%c0_5, %c0_6] : memref<256x128xf32, #tpu.memory_space<vmem>>, vector<256x128xf32>
    tpu.vector_store %arg4[%c0_5, %c0_6], %5 {strides = array<i32>} : memref<256x128xf32, #tpu.memory_space<vmem>>, vector<256x128xf32>,
    return
  }
  func.func @transform_0(%arg0: i32) -> (i32, i32) {
    %c0_i32 = arith.constant 0 : i32
    %c0_i32_0 = arith.constant 0 : i32
    return %arg0, %c0_i32 : i32, i32
  }
  func.func @transform_1(%arg0: i32) -> (i32, i32) {
    %c0_i32 = arith.constant 0 : i32
    %c0_i32_0 = arith.constant 0 : i32
    %c0_i32_1 = arith.constant 0 : i32
    return %c0_i32, %c0_i32_0 : i32, i32
  }
  func.func @transform_2(%arg0: i32) -> (i32, i32) {
    %c0_i32 = arith.constant 0 : i32
    %c0_i32_0 = arith.constant 0 : i32
    %c0_i32_1 = arith.constant 0 : i32
    return %c0_i32, %c0_i32_0 : i32, i32
  }
  func.func @transform_3(%arg0: i32) -> (i32, i32) {
    %c0_i32 = arith.constant 0 : i32
    %c0_i32_0 = arith.constant 0 : i32
    return %arg0, %c0_i32 : i32, i32
  }
}

</mosaic_0001>

<llo_original>
// kernel: deepnet_forward.1
$region0: #{deepnet_forward.1}
  #allocation0 [shape = 'u32[]', space=smem, size = 0x4, offset = 0x4, fixed_abs, tag = 'smem constant byte address 0x4 - core index']
  #allocation1 [shape = 'u32[144,128]{1,0:T(1,128)}', space=vmem, size = 0x12000, scoped, tag = 'internal scratch']
  %s0 = inlined_call_operand.vmem [shape: bf16[512,896], index: 0, kind: input, shape index: {}]
  %s1 = inlined_call_operand.vmem [shape: bf16[896,128], index: 1, kind: input, shape index: {}]
  %s2 = inlined_call_operand.vmem [shape: f32[1,128], index: 2, kind: input, shape index: {}]
  %s3 = inlined_call_operand.vmem [shape: f32[512,128], index: 3, kind: output, shape index: {}]
  %s4 = sld [smem:[#allocation0]]
  $region45: #{deepnet_forward.1} parent=0
    _
  %s6 = ssub.s32 1, %s4
  %s7 = scalar_select 0, %s6, %s4
  loop: start=0, step=1, limit=4
  $region2: #{deepnet_forward.1} parent=0 // loop_pre_header
    _
  $region3: #{deepnet_forward.1} parent=0 // loop_header
    %s9 = sphi 0, %s13
    %p10 = scmp.ge.s32.totalorder %s9, 4
    %s19 = sphi 0, %s21
    %s22 = sphi 0, %s19
    %s23 = sphi 0, %s22
    %s39 = sphi 0, %s23
    %s43 = sphi 0, %s43
    %s45 = sphi 0, %s43
    %s46 = sphi 0, %s45
    %s60 = sphi 0, %s46
    %s64 = sphi 0, %s64
    %s66 = sphi 0, %s64
    %s67 = sphi 0, %s66
    %s81 = sphi 0, %s67
    %s87 = sphi 0, %s89
    %s90 = sphi 0, %s87
    %s91 = sphi 0, %s90
    %s107 = sphi 0, %s91
  $region4: #{deepnet_forward.1} parent=0 // loop_header_branch
    %12 = sbr.rel (%p10) target = $region8
  $region5: #{deepnet_forward.1} parent=0 // loop_body
    %s14 = ssub.s32 %s9, 1
    %s15 = ssub.s32 %s9, 2
    %s16 = sadd.s32 %s9, 1
    %s17 = ssub.s32 %s9, %s16
    %p18 = scmp.eq.s32.totalorder %s17, 0
    %s20 = sadd.s32 %s19, 1
    %s21 = scalar_select %p18, %s19, %s20
    %p24 = pneg %p18
    %p25 = scmp.eq.s32.totalorder %s9, 1
    %p26 = por %p24, %p25
    %p27 = scmp.ne.s32.totalorder %s19, %s22
    %p28 = scmp.eq.s32.totalorder %s9, 0
    %p29 = por %p27, %p28
    %p30 = scmp.ne.s32.totalorder %s19, %s22
    %p31 = scmp.eq.s32.totalorder %s14, 1
    %p32 = por %p30, %p31
    %p33 = scmp.ne.s32.totalorder %s22, %s23
    %p34 = scmp.eq.s32.totalorder %s14, 0
    %p35 = por %p33, %p34
    %p36 = scmp.ne.s32.totalorder %s22, %s23
    %p37 = scmp.eq.s32.totalorder %s15, 1
    %p38 = por %p36, %p37
    %p40 = scmp.ne.s32.totalorder %s23, %s39
    %p41 = scmp.eq.s32.totalorder %s15, 0
    %p42 = por %p40, %p41
    %s44 = sadd.s32 %s43, 1
    %p47 = scmp.eq.s32.totalorder %s9, 1
    %p48 = scmp.ne.s32.totalorder %s43, %s45
    %p49 = scmp.eq.s32.totalorder %s9, 0
    %p50 = por %p48, %p49
    %p51 = scmp.ne.s32.totalorder %s43, %s45
    %p52 = scmp.eq.s32.totalorder %s14, 1
    %p53 = por %p51, %p52
    %p54 = scmp.ne.s32.totalorder %s45, %s46
    %p55 = scmp.eq.s32.totalorder %s14, 0
    %p56 = por %p54, %p55
    %p57 = scmp.ne.s32.totalorder %s45, %s46
    %p58 = scmp.eq.s32.totalorder %s15, 1
    %p59 = por %p57, %p58
    %p61 = scmp.ne.s32.totalorder %s46, %s60
    %p62 = scmp.eq.s32.totalorder %s15, 0
    %p63 = por %p61, %p62
    %s65 = sadd.s32 %s64, 1
    %p68 = scmp.eq.s32.totalorder %s9, 1
    %p69 = scmp.ne.s32.totalorder %s64, %s66
    %p70 = scmp.eq.s32.totalorder %s9, 0
    %p71 = por %p69, %p70
    %p72 = scmp.ne.s32.totalorder %s64, %s66
    %p73 = scmp.eq.s32.totalorder %s14, 1
    %p74 = por %p72, %p73
    %p75 = scmp.ne.s32.totalorder %s66, %s67
    %p76 = scmp.eq.s32.totalorder %s14, 0
    %p77 = por %p75, %p76
    %p78 = scmp.ne.s32.totalorder %s66, %s67
    %p79 = scmp.eq.s32.totalorder %s15, 1
    %p80 = por %p78, %p79
    %p82 = scmp.ne.s32.totalorder %s67, %s81
    %p83 = scmp.eq.s32.totalorder %s15, 0
    %p84 = por %p82, %p83
    %s85 = ssub.s32 %s9, %s16
    %p86 = scmp.eq.s32.totalorder %s85, 0
    %s88 = sadd.s32 %s87, 1
    %s89 = scalar_select %p86, %s87, %s88
    %p92 = pneg %p86
    %p93 = scmp.eq.s32.totalorder %s9, 1
    %p94 = por %p92, %p93
    %p95 = scmp.ne.s32.totalorder %s87, %s90
    %p96 = scmp.eq.s32.totalorder %s9, 0
    %p97 = por %p95, %p96
    %p98 = scmp.ne.s32.totalorder %s87, %s90
    %p99 = scmp.eq.s32.totalorder %s14, 1
    %p100 = por %p98, %p99
    %p101 = scmp.ne.s32.totalorder %s90, %s91
    %p102 = scmp.eq.s32.totalorder %s14, 0
    %p103 = por %p101, %p102
    %p104 = scmp.ne.s32.totalorder %s90, %s91
    %p105 = scmp.eq.s32.totalorder %s15, 1
    %p106 = por %p104, %p105
    %p108 = scmp.ne.s32.totalorder %s91, %s107
    %p109 = scmp.eq.s32.totalorder %s15, 0
    %p110 = por %p108, %p109
    %p111 = scmp.le.s32.totalorder 1, %s9
    %p112 = scmp.lt.s32.totalorder %s9, 3
    %p113 = pnand %p111, %p112
    %p114 = pneg %p113
    // Predicated region
    $region9: #{deepnet_forward.1} parent=5 // pred_check
      _
    $region10: #{deepnet_forward.1} parent=5 // pred_check_branch
      %116 = sbr.rel (%p113) target = $region12
    $region11: #{deepnet_forward.1} parent=5 // pred_region
      %s117 = ssub.s32 %s9, 1
      // Predicated region
      $region13: #{deepnet_forward.1} parent=11 // pred_check
        %p118 = pneg %p56
      $region14: #{deepnet_forward.1} parent=11 // pred_check_branch
        %120 = sbr.rel (%p118) target = $region16
      $region15: #{deepnet_forward.1} parent=11 // pred_region
        _
      $region16: #{deepnet_forward.1} parent=11 // pred_fallthru
        _
      // Predicated region
      $region17: #{deepnet_forward.1} parent=11 // pred_check
        %p121 = pneg %p77
      $region18: #{deepnet_forward.1} parent=11 // pred_check_branch
        %123 = sbr.rel (%p121) target = $region20
      $region19: #{deepnet_forward.1} parent=11 // pred_region
        _
      $region20: #{deepnet_forward.1} parent=11 // pred_fallthru
        _
    $region12: #{deepnet_forward.1} parent=5 // pred_fallthru
      _
    %p124 = scmp.lt.s32.totalorder %s9, 2
    // Predicated region
    $region21: #{deepnet_forward.1} parent=5 // pred_check
      %p125 = pneg %p124
    $region22: #{deepnet_forward.1} parent=5 // pred_check_branch
      %127 = sbr.rel (%p125) target = $region24
    $region23: #{deepnet_forward.1} parent=5 // pred_region
      // Predicated region
      $region25: #{deepnet_forward.1} parent=23 // pred_check
        %p128 = pneg %p29
      $region26: #{deepnet_forward.1} parent=23 // pred_check_branch
        %130 = sbr.rel (%p128) target = $region28
      $region27: #{deepnet_forward.1} parent=23 // pred_region
        %s131 = smul.u32 32, %s9
        %p132 = scmp.lt.s32.totalorder %s131, 63
        %s133 = scalar_select %p132, %s131, 63
        %s134 = smul.addr %s133, 7
        %s135 = smul.addr %s134, 4
        %s136 = scalar_lea.vmem %s0, %s135
        %s137 = smul.u32 32, %s9
      $region28: #{deepnet_forward.1} parent=23 // pred_fallthru
        _
    $region24: #{deepnet_forward.1} parent=5 // pred_fallthru
      _
    %p138 = scmp.le.s32.totalorder 1, %s9
    %p139 = scmp.lt.s32.totalorder %s9, 3
    %p140 = pnand %p138, %p139
    %p141 = pneg %p140
    // Predicated region
    $region29: #{deepnet_forward.1} parent=5 // pred_check
      _
    $region30: #{deepnet_forward.1} parent=5 // pred_check_branch
      %143 = sbr.rel (%p140) target = $region32
    $region31: #{deepnet_forward.1} parent=5 // pred_region
      %s144 = ssub.s32 %s9, 1
      %s145 = smul.u32 32, %s14
      %p146 = scmp.lt.s32.totalorder %s145, 63
      %s147 = scalar_select %p146, %s145, 63
      %s148 = smul.addr %s147, 7
      %s149 = smul.addr %s148, 4
      %s150 = scalar_lea.vmem %s0, %s149
      %p151 = pneg %p35
      %p152 = pneg %p32
      %p153 = pneg %p56
      %p154 = pneg %p53
      %p155 = pneg %p77
      %p156 = pneg %p74
      %p157 = pneg %p103
      %p158 = pneg %p100
      %s159 = smul.u32 32, %s14
      %p160 = scmp.lt.s32.totalorder %s159, 63
      %s161 = scalar_select %p160, %s159, 63
      %s162 = smul.addr %s161, 8
      %s163 = scalar_lea.vmem %s3, %s162
      %s164 = smul.u32 32, %s14
      %p165 = scmp.lt.s32.totalorder %s164, 63
      %s166 = scalar_select %p165, %s164, 63
      %s167 = smul.addr %s166, 7
      %s168 = smul.addr %s167, 4
      %s169 = scalar_lea.vmem %s0, %s168
      %s170 = smul.u32 32, %s14
      %s171 = smul.u32 32, %s14
      %p172 = scmp.lt.s32.totalorder %s171, 63
      %s173 = scalar_select %p172, %s171, 63
      %s174 = smul.addr %s173, 8
      %s175 = scalar_lea.vmem %s3, %s174
      %s176 = smul.u32 32, %s14
      %v178 = vld [vmem:[%s169] sm:$0xff]
      %v179 = vld [vmem:[%s169 + $0x8] sm:$0xff]
      %v180 = vld [vmem:[%s169 + $0x10] sm:$0xff]
      %v181 = vld [vmem:[%s169 + $0x18] sm:$0xf]
      %v182 = vld [vmem:[%s169 + $0x1c] sm:$0xff]
      %v183 = vld [vmem:[%s169 + $0x24] sm:$0xff]
      %v184 = vld [vmem:[%s169 + $0x2c] sm:$0xff]
      %v185 = vld [vmem:[%s169 + $0x34] sm:$0xf]
      %v186 = vld [vmem:[%s169 + $0x38] sm:$0xff]
      %v187 = vld [vmem:[%s169 + $0x40] sm:$0xff]
      %v188 = vld [vmem:[%s169 + $0x48] sm:$0xff]
      %v189 = vld [vmem:[%s169 + $0x50] sm:$0xf]
      %v190 = vld [vmem:[%s169 + $0x54] sm:$0xff]
      %v191 = vld [vmem:[%s169 + $0x5c] sm:$0xff]
      %v192 = vld [vmem:[%s169 + $0x64] sm:$0xff]
      %v193 = vld [vmem:[%s169 + $0x6c] sm:$0xf]
      %v194 = vld [vmem:[%s169 + $0x70] sm:$0xff]
      %v195 = vld [vmem:[%s169 + $0x78] sm:$0xff]
      %v196 = vld [vmem:[%s169 + $0x80] sm:$0xff]
      %v197 = vld [vmem:[%s169 + $0x88] sm:$0xf]
      %v198 = vld [vmem:[%s169 + $0x8c] sm:$0xff]
      %v199 = vld [vmem:[%s169 + $0x94] sm:$0xff]
      %v200 = vld [vmem:[%s169 + $0x9c] sm:$0xff]
      %v201 = vld [vmem:[%s169 + $0xa4] sm:$0xf]
      %v202 = vld [vmem:[%s169 + $0xa8] sm:$0xff]
      %v203 = vld [vmem:[%s169 + $0xb0] sm:$0xff]
      %v204 = vld [vmem:[%s169 + $0xb8] sm:$0xff]
      %v205 = vld [vmem:[%s169 + $0xc0] sm:$0xf]
      %v206 = vld [vmem:[%s169 + $0xc4] sm:$0xff]
      %v207 = vld [vmem:[%s169 + $0xcc] sm:$0xff]
      %v208 = vld [vmem:[%s169 + $0xd4] sm:$0xff]
      %v209 = vld [vmem:[%s169 + $0xdc] sm:$0xf]
      %v210 = vld [vmem:[%s169 + $0xe0] sm:$0xff]
      %v211 = vld [vmem:[%s169 + $0xe8] sm:$0xff]
      %v212 = vld [vmem:[%s169 + $0xf0] sm:$0xff]
      %v213 = vld [vmem:[%s169 + $0xf8] sm:$0xf]
      %v214 = vld [vmem:[%s169 + $0xfc] sm:$0xff]
      %v215 = vld [vmem:[%s169 + $0x104] sm:$0xff]
      %v216 = vld [vmem:[%s169 + $0x10c] sm:$0xff]
      %v217 = vld [vmem:[%s169 + $0x114] sm:$0xf]
      %v218 = vld [vmem:[%s169 + $0x118] sm:$0xff]
      %v219 = vld [vmem:[%s169 + $0x120] sm:$0xff]
      %v220 = vld [vmem:[%s169 + $0x128] sm:$0xff]
      %v221 = vld [vmem:[%s169 + $0x130] sm:$0xf]
      %v222 = vld [vmem:[%s169 + $0x134] sm:$0xff]
      %v223 = vld [vmem:[%s169 + $0x13c] sm:$0xff]
      %v224 = vld [vmem:[%s169 + $0x144] sm:$0xff]
      %v225 = vld [vmem:[%s169 + $0x14c] sm:$0xf]
      %v226 = vld [vmem:[%s169 + $0x150] sm:$0xff]
      %v227 = vld [vmem:[%s169 + $0x158] sm:$0xff]
      %v228 = vld [vmem:[%s169 + $0x160] sm:$0xff]
      %v229 = vld [vmem:[%s169 + $0x168] sm:$0xf]
      %v230 = vld [vmem:[%s169 + $0x16c] sm:$0xff]
      %v231 = vld [vmem:[%s169 + $0x174] sm:$0xff]
      %v232 = vld [vmem:[%s169 + $0x17c] sm:$0xff]
      %v233 = vld [vmem:[%s169 + $0x184] sm:$0xf]
      %v234 = vld [vmem:[%s169 + $0x188] sm:$0xff]
      %v235 = vld [vmem:[%s169 + $0x190] sm:$0xff]
      %v236 = vld [vmem:[%s169 + $0x198] sm:$0xff]
      %v237 = vld [vmem:[%s169 + $0x1a0] sm:$0xf]
      %v238 = vld [vmem:[%s169 + $0x1a4] sm:$0xff]
      %v239 = vld [vmem:[%s169 + $0x1ac] sm:$0xff]
      %v240 = vld [vmem:[%s169 + $0x1b4] sm:$0xff]
      %v241 = vld [vmem:[%s169 + $0x1bc] sm:$0xf]
      %v242 = vld [vmem:[%s169 + $0x1c0] sm:$0xff]
      %v243 = vld [vmem:[%s169 + $0x1c8] sm:$0xff]
      %v244 = vld [vmem:[%s169 + $0x1d0] sm:$0xff]
      %v245 = vld [vmem:[%s169 + $0x1d8] sm:$0xf]
      %v246 = vld [vmem:[%s169 + $0x1dc] sm:$0xff]
      %v247 = vld [vmem:[%s169 + $0x1e4] sm:$0xff]
      %v248 = vld [vmem:[%s169 + $0x1ec] sm:$0xff]
      %v249 = vld [vmem:[%s169 + $0x1f4] sm:$0xf]
      %v250 = vld [vmem:[%s169 + $0x1f8] sm:$0xff]
      %v251 = vld [vmem:[%s169 + $0x200] sm:$0xff]
      %v252 = vld [vmem:[%s169 + $0x208] sm:$0xff]
      %v253 = vld [vmem:[%s169 + $0x210] sm:$0xf]
      %v254 = vld [vmem:[%s169 + $0x214] sm:$0xff]
      %v255 = vld [vmem:[%s169 + $0x21c] sm:$0xff]
      %v256 = vld [vmem:[%s169 + $0x224] sm:$0xff]
      %v257 = vld [vmem:[%s169 + $0x22c] sm:$0xf]
      %v258 = vld [vmem:[%s169 + $0x230] sm:$0xff]
      %v259 = vld [vmem:[%s169 + $0x238] sm:$0xff]
      %v260 = vld [vmem:[%s169 + $0x240] sm:$0xff]
      %v261 = vld [vmem:[%s169 + $0x248] sm:$0xf]
      %v262 = vld [vmem:[%s169 + $0x24c] sm:$0xff]
      %v263 = vld [vmem:[%s169 + $0x254] sm:$0xff]
      %v264 = vld [vmem:[%s169 + $0x25c] sm:$0xff]
      %v265 = vld [vmem:[%s169 + $0x264] sm:$0xf]
      %v266 = vld [vmem:[%s169 + $0x268] sm:$0xff]
      %v267 = vld [vmem:[%s169 + $0x270] sm:$0xff]
      %v268 = vld [vmem:[%s169 + $0x278] sm:$0xff]
      %v269 = vld [vmem:[%s169 + $0x280] sm:$0xf]
      %v270 = vld [vmem:[%s169 + $0x284] sm:$0xff]
      %v271 = vld [vmem:[%s169 + $0x28c] sm:$0xff]
      %v272 = vld [vmem:[%s169 + $0x294] sm:$0xff]
      %v273 = vld [vmem:[%s169 + $0x29c] sm:$0xf]
      %v274 = vld [vmem:[%s169 + $0x2a0] sm:$0xff]
      %v275 = vld [vmem:[%s169 + $0x2a8] sm:$0xff]
      %v276 = vld [vmem:[%s169 + $0x2b0] sm:$0xff]
      %v277 = vld [vmem:[%s169 + $0x2b8] sm:$0xf]
      %v278 = vld [vmem:[%s169 + $0x2bc] sm:$0xff]
      %v279 = vld [vmem:[%s169 + $0x2c4] sm:$0xff]
      %v280 = vld [vmem:[%s169 + $0x2cc] sm:$0xff]
      %v281 = vld [vmem:[%s169 + $0x2d4] sm:$0xf]
      %v282 = vld [vmem:[%s169 + $0x2d8] sm:$0xff]
      %v283 = vld [vmem:[%s169 + $0x2e0] sm:$0xff]
      %v284 = vld [vmem:[%s169 + $0x2e8] sm:$0xff]
      %v285 = vld [vmem:[%s169 + $0x2f0] sm:$0xf]
      %v286 = vld [vmem:[%s169 + $0x2f4] sm:$0xff]
      %v287 = vld [vmem:[%s169 + $0x2fc] sm:$0xff]
      %v288 = vld [vmem:[%s169 + $0x304] sm:$0xff]
      %v289 = vld [vmem:[%s169 + $0x30c] sm:$0xf]
      %v290 = vld [vmem:[%s169 + $0x310] sm:$0xff]
      %v291 = vld [vmem:[%s169 + $0x318] sm:$0xff]
      %v292 = vld [vmem:[%s169 + $0x320] sm:$0xff]
      %v293 = vld [vmem:[%s169 + $0x328] sm:$0xf]
      %v294 = vld [vmem:[%s169 + $0x32c] sm:$0xff]
      %v295 = vld [vmem:[%s169 + $0x334] sm:$0xff]
      %v296 = vld [vmem:[%s169 + $0x33c] sm:$0xff]
      %v297 = vld [vmem:[%s169 + $0x344] sm:$0xf]
      %v298 = vld [vmem:[%s169 + $0x348] sm:$0xff]
      %v299 = vld [vmem:[%s169 + $0x350] sm:$0xff]
      %v300 = vld [vmem:[%s169 + $0x358] sm:$0xff]
      %v301 = vld [vmem:[%s169 + $0x360] sm:$0xf]
      %v302 = vld [vmem:[%s169 + $0x364] sm:$0xff]
      %v303 = vld [vmem:[%s169 + $0x36c] sm:$0xff]
      %v304 = vld [vmem:[%s169 + $0x374] sm:$0xff]
      %v305 = vld [vmem:[%s169 + $0x37c] sm:$0xf]
      %v306 = vld [vmem:[%s1] sm:$0xf]
      %v307 = vld [vmem:[%s1 + $0x4] sm:$0xf]
      %v308 = vld [vmem:[%s1 + $0x8] sm:$0xf]
      %v309 = vld [vmem:[%s1 + $0xc] sm:$0xf]
      %v310 = vld [vmem:[%s1 + $0x10] sm:$0xf]
      %v311 = vld [vmem:[%s1 + $0x14] sm:$0xf]
      %v312 = vld [vmem:[%s1 + $0x18] sm:$0xf]
      %v313 = vld [vmem:[%s1 + $0x1c] sm:$0xf]
      %v314 = vld [vmem:[%s1 + $0x20] sm:$0xf]
      %v315 = vld [vmem:[%s1 + $0x24] sm:$0xf]
      %v316 = vld [vmem:[%s1 + $0x28] sm:$0xf]
      %v317 = vld [vmem:[%s1 + $0x2c] sm:$0xf]
      %v318 = vld [vmem:[%s1 + $0x30] sm:$0xf]
      %v319 = vld [vmem:[%s1 + $0x34] sm:$0xf]
      %v320 = vld [vmem:[%s1 + $0x38] sm:$0xf]
      %v321 = vld [vmem:[%s1 + $0x3c] sm:$0xf]
      %v322 = vld [vmem:[%s1 + $0x40] sm:$0xf]
      %v323 = vld [vmem:[%s1 + $0x44] sm:$0xf]
      %v324 = vld [vmem:[%s1 + $0x48] sm:$0xf]
      %v325 = vld [vmem:[%s1 + $0x4c] sm:$0xf]
      %v326 = vld [vmem:[%s1 + $0x50] sm:$0xf]
      %v327 = vld [vmem:[%s1 + $0x54] sm:$0xf]
      %v328 = vld [vmem:[%s1 + $0x58] sm:$0xf]
      %v329 = vld [vmem:[%s1 + $0x5c] sm:$0xf]
      %v330 = vld [vmem:[%s1 + $0x60] sm:$0xf]
      %v331 = vld [vmem:[%s1 + $0x64] sm:$0xf]
      %v332 = vld [vmem:[%s1 + $0x68] sm:$0xf]
      %v333 = vld [vmem:[%s1 + $0x6c] sm:$0xf]
      %v334 = vld [vmem:[%s1 + $0x70] sm:$0xf]
      %v335 = vld [vmem:[%s1 + $0x74] sm:$0xf]
      %v336 = vld [vmem:[%s1 + $0x78] sm:$0xf]
      %v337 = vld [vmem:[%s1 + $0x7c] sm:$0xf]
      %v338 = vld [vmem:[%s1 + $0x80] sm:$0xf]
      %v339 = vld [vmem:[%s1 + $0x84] sm:$0xf]
      %v340 = vld [vmem:[%s1 + $0x88] sm:$0xf]
      %v341 = vld [vmem:[%s1 + $0x8c] sm:$0xf]
      %v342 = vld [vmem:[%s1 + $0x90] sm:$0xf]
      %v343 = vld [vmem:[%s1 + $0x94] sm:$0xf]
      %v344 = vld [vmem:[%s1 + $0x98] sm:$0xf]
      %v345 = vld [vmem:[%s1 + $0x9c] sm:$0xf]
      %v346 = vld [vmem:[%s1 + $0xa0] sm:$0xf]
      %v347 = vld [vmem:[%s1 + $0xa4] sm:$0xf]
      %v348 = vld [vmem:[%s1 + $0xa8] sm:$0xf]
      %v349 = vld [vmem:[%s1 + $0xac] sm:$0xf]
      %v350 = vld [vmem:[%s1 + $0xb0] sm:$0xf]
      %v351 = vld [vmem:[%s1 + $0xb4] sm:$0xf]
      %v352 = vld [vmem:[%s1 + $0xb8] sm:$0xf]
      %v353 = vld [vmem:[%s1 + $0xbc] sm:$0xf]
      %v354 = vld [vmem:[%s1 + $0xc0] sm:$0xf]
      %v355 = vld [vmem:[%s1 + $0xc4] sm:$0xf]
      %v356 = vld [vmem:[%s1 + $0xc8] sm:$0xf]
      %v357 = vld [vmem:[%s1 + $0xcc] sm:$0xf]
      %v358 = vld [vmem:[%s1 + $0xd0] sm:$0xf]
      %v359 = vld [vmem:[%s1 + $0xd4] sm:$0xf]
      %v360 = vld [vmem:[%s1 + $0xd8] sm:$0xf]
      %v361 = vld [vmem:[%s1 + $0xdc] sm:$0xf]
      %v362 = vld [vmem:[%s1 + $0xe0] sm:$0xf]
      %v363 = vld [vmem:[%s1 + $0xe4] sm:$0xf]
      %v364 = vld [vmem:[%s1 + $0xe8] sm:$0xf]
      %v365 = vld [vmem:[%s1 + $0xec] sm:$0xf]
      %v366 = vld [vmem:[%s1 + $0xf0] sm:$0xf]
      %v367 = vld [vmem:[%s1 + $0xf4] sm:$0xf]
      %v368 = vld [vmem:[%s1 + $0xf8] sm:$0xf]
      %v369 = vld [vmem:[%s1 + $0xfc] sm:$0xf]
      %v370 = vld [vmem:[%s1 + $0x100] sm:$0xf]
      %v371 = vld [vmem:[%s1 + $0x104] sm:$0xf]
      %v372 = vld [vmem:[%s1 + $0x108] sm:$0xf]
      %v373 = vld [vmem:[%s1 + $0x10c] sm:$0xf]
      %v374 = vld [vmem:[%s1 + $0x110] sm:$0xf]
      %v375 = vld [vmem:[%s1 + $0x114] sm:$0xf]
      %v376 = vld [vmem:[%s1 + $0x118] sm:$0xf]
      %v377 = vld [vmem:[%s1 + $0x11c] sm:$0xf]
      %v378 = vld [vmem:[%s1 + $0x120] sm:$0xf]
      %v379 = vld [vmem:[%s1 + $0x124] sm:$0xf]
      %v380 = vld [vmem:[%s1 + $0x128] sm:$0xf]
      %v381 = vld [vmem:[%s1 + $0x12c] sm:$0xf]
      %v382 = vld [vmem:[%s1 + $0x130] sm:$0xf]
      %v383 = vld [vmem:[%s1 + $0x134] sm:$0xf]
      %v384 = vld [vmem:[%s1 + $0x138] sm:$0xf]
      %v385 = vld [vmem:[%s1 + $0x13c] sm:$0xf]
      %v386 = vld [vmem:[%s1 + $0x140] sm:$0xf]
      %v387 = vld [vmem:[%s1 + $0x144] sm:$0xf]
      %v388 = vld [vmem:[%s1 + $0x148] sm:$0xf]
      %v389 = vld [vmem:[%s1 + $0x14c] sm:$0xf]
      %v390 = vld [vmem:[%s1 + $0x150] sm:$0xf]
      %v391 = vld [vmem:[%s1 + $0x154] sm:$0xf]
      %v392 = vld [vmem:[%s1 + $0x158] sm:$0xf]
      %v393 = vld [vmem:[%s1 + $0x15c] sm:$0xf]
      %v394 = vld [vmem:[%s1 + $0x160] sm:$0xf]
      %v395 = vld [vmem:[%s1 + $0x164] sm:$0xf]
      %v396 = vld [vmem:[%s1 + $0x168] sm:$0xf]
      %v397 = vld [vmem:[%s1 + $0x16c] sm:$0xf]
      %v398 = vld [vmem:[%s1 + $0x170] sm:$0xf]
      %v399 = vld [vmem:[%s1 + $0x174] sm:$0xf]
      %v400 = vld [vmem:[%s1 + $0x178] sm:$0xf]
      %v401 = vld [vmem:[%s1 + $0x17c] sm:$0xf]
      %v402 = vld [vmem:[%s1 + $0x180] sm:$0xf]
      %v403 = vld [vmem:[%s1 + $0x184] sm:$0xf]
      %v404 = vld [vmem:[%s1 + $0x188] sm:$0xf]
      %v405 = vld [vmem:[%s1 + $0x18c] sm:$0xf]
      %v406 = vld [vmem:[%s1 + $0x190] sm:$0xf]
      %v407 = vld [vmem:[%s1 + $0x194] sm:$0xf]
      %v408 = vld [vmem:[%s1 + $0x198] sm:$0xf]
      %v409 = vld [vmem:[%s1 + $0x19c] sm:$0xf]
      %v410 = vld [vmem:[%s1 + $0x1a0] sm:$0xf]
      %v411 = vld [vmem:[%s1 + $0x1a4] sm:$0xf]
      %v412 = vld [vmem:[%s1 + $0x1a8] sm:$0xf]
      %v413 = vld [vmem:[%s1 + $0x1ac] sm:$0xf]
      %v414 = vld [vmem:[%s1 + $0x1b0] sm:$0xf]
      %v415 = vld [vmem:[%s1 + $0x1b4] sm:$0xf]
      %v416 = vld [vmem:[%s1 + $0x1b8] sm:$0xf]
      %v417 = vld [vmem:[%s1 + $0x1bc] sm:$0xf]
      %v418 = vld [vmem:[%s2] sm:$0x1]
      %v420 = vlaneseq
      %v421 = vshrl.u32 %v420, 7
      %v422 = vsub.s32 0, %v421
      %v423 = vrot.slane %v418, %v422
      %v553 = vunpack.c.l.b16 %v178
      %v554 = vunpack.c.h.b16 %v178
      %v555 = vunpack.c.l.b16 %v179
      %v556 = vunpack.c.h.b16 %v179
      %v557 = vunpack.c.l.b16 %v180
      %v558 = vunpack.c.h.b16 %v180
      %v559 = vunpack.c.l.b16 %v181
      %v560 = vunpack.c.l.b16 %v182
      %v561 = vunpack.c.h.b16 %v182
      %v562 = vunpack.c.l.b16 %v183
      %v563 = vunpack.c.h.b16 %v183
      %v564 = vunpack.c.l.b16 %v184
      %v565 = vunpack.c.h.b16 %v184
      %v566 = vunpack.c.l.b16 %v185
      %v567 = vunpack.c.l.b16 %v186
      %v568 = vunpack.c.h.b16 %v186
      %v569 = vunpack.c.l.b16 %v187
      %v570 = vunpack.c.h.b16 %v187
      %v571 = vunpack.c.l.b16 %v188
      %v572 = vunpack.c.h.b16 %v188
      %v573 = vunpack.c.l.b16 %v189
      %v574 = vunpack.c.l.b16 %v190
      %v575 = vunpack.c.h.b16 %v190
      %v576 = vunpack.c.l.b16 %v191
      %v577 = vunpack.c.h.b16 %v191
      %v578 = vunpack.c.l.b16 %v192
      %v579 = vunpack.c.h.b16 %v192
      %v580 = vunpack.c.l.b16 %v193
      %v581 = vunpack.c.l.b16 %v194
      %v582 = vunpack.c.h.b16 %v194
      %v583 = vunpack.c.l.b16 %v195
      %v584 = vunpack.c.h.b16 %v195
      %v585 = vunpack.c.l.b16 %v196
      %v586 = vunpack.c.h.b16 %v196
      %v587 = vunpack.c.l.b16 %v197
      %v588 = vunpack.c.l.b16 %v198
      %v589 = vunpack.c.h.b16 %v198
      %v590 = vunpack.c.l.b16 %v199
      %v591 = vunpack.c.h.b16 %v199
      %v592 = vunpack.c.l.b16 %v200
      %v593 = vunpack.c.h.b16 %v200
      %v594 = vunpack.c.l.b16 %v201
      %v595 = vunpack.c.l.b16 %v202
      %v596 = vunpack.c.h.b16 %v202
      %v597 = vunpack.c.l.b16 %v203
      %v598 = vunpack.c.h.b16 %v203
      %v599 = vunpack.c.l.b16 %v204
      %v600 = vunpack.c.h.b16 %v204
      %v601 = vunpack.c.l.b16 %v205
      %v602 = vunpack.c.l.b16 %v206
      %v603 = vunpack.c.h.b16 %v206
      %v604 = vunpack.c.l.b16 %v207
      %v605 = vunpack.c.h.b16 %v207
      %v606 = vunpack.c.l.b16 %v208
      %v607 = vunpack.c.h.b16 %v208
      %v608 = vunpack.c.l.b16 %v209
      %v609 = vunpack.c.l.b16 %v210
      %v610 = vunpack.c.h.b16 %v210
      %v611 = vunpack.c.l.b16 %v211
      %v612 = vunpack.c.h.b16 %v211
      %v613 = vunpack.c.l.b16 %v212
      %v614 = vunpack.c.h.b16 %v212
      %v615 = vunpack.c.l.b16 %v213
      %v616 = vunpack.c.l.b16 %v214
      %v617 = vunpack.c.h.b16 %v214
      %v618 = vunpack.c.l.b16 %v215
      %v619 = vunpack.c.h.b16 %v215
      %v620 = vunpack.c.l.b16 %v216
      %v621 = vunpack.c.h.b16 %v216
      %v622 = vunpack.c.l.b16 %v217
      %v623 = vunpack.c.l.b16 %v218
      %v624 = vunpack.c.h.b16 %v218
      %v625 = vunpack.c.l.b16 %v219
      %v626 = vunpack.c.h.b16 %v219
      %v627 = vunpack.c.l.b16 %v220
      %v628 = vunpack.c.h.b16 %v220
      %v629 = vunpack.c.l.b16 %v221
      %v630 = vunpack.c.l.b16 %v222
      %v631 = vunpack.c.h.b16 %v222
      %v632 = vunpack.c.l.b16 %v223
      %v633 = vunpack.c.h.b16 %v223
      %v634 = vunpack.c.l.b16 %v224
      %v635 = vunpack.c.h.b16 %v224
      %v636 = vunpack.c.l.b16 %v225
      %v637 = vunpack.c.l.b16 %v226
      %v638 = vunpack.c.h.b16 %v226
      %v639 = vunpack.c.l.b16 %v227
      %v640 = vunpack.c.h.b16 %v227
      %v641 = vunpack.c.l.b16 %v228
      %v642 = vunpack.c.h.b16 %v228
      %v643 = vunpack.c.l.b16 %v229
      %v644 = vunpack.c.l.b16 %v230
      %v645 = vunpack.c.h.b16 %v230
      %v646 = vunpack.c.l.b16 %v231
      %v647 = vunpack.c.h.b16 %v231
      %v648 = vunpack.c.l.b16 %v232
      %v649 = vunpack.c.h.b16 %v232
      %v650 = vunpack.c.l.b16 %v233
      %v651 = vunpack.c.l.b16 %v234
      %v652 = vunpack.c.h.b16 %v234
      %v653 = vunpack.c.l.b16 %v235
      %v654 = vunpack.c.h.b16 %v235
      %v655 = vunpack.c.l.b16 %v236
      %v656 = vunpack.c.h.b16 %v236
      %v657 = vunpack.c.l.b16 %v237
      %v658 = vunpack.c.l.b16 %v238
      %v659 = vunpack.c.h.b16 %v238
      %v660 = vunpack.c.l.b16 %v239
      %v661 = vunpack.c.h.b16 %v239
      %v662 = vunpack.c.l.b16 %v240
      %v663 = vunpack.c.h.b16 %v240
      %v664 = vunpack.c.l.b16 %v241
      %v665 = vunpack.c.l.b16 %v242
      %v666 = vunpack.c.h.b16 %v242
      %v667 = vunpack.c.l.b16 %v243
      %v668 = vunpack.c.h.b16 %v243
      %v669 = vunpack.c.l.b16 %v244
      %v670 = vunpack.c.h.b16 %v244
      %v671 = vunpack.c.l.b16 %v245
      %v672 = vunpack.c.l.b16 %v246
      %v673 = vunpack.c.h.b16 %v246
      %v674 = vunpack.c.l.b16 %v247
      %v675 = vunpack.c.h.b16 %v247
      %v676 = vunpack.c.l.b16 %v248
      %v677 = vunpack.c.h.b16 %v248
      %v678 = vunpack.c.l.b16 %v249
      %v679 = vunpack.c.l.b16 %v250
      %v680 = vunpack.c.h.b16 %v250
      %v681 = vunpack.c.l.b16 %v251
      %v682 = vunpack.c.h.b16 %v251
      %v683 = vunpack.c.l.b16 %v252
      %v684 = vunpack.c.h.b16 %v252
      %v685 = vunpack.c.l.b16 %v253
      %v686 = vunpack.c.l.b16 %v254
      %v687 = vunpack.c.h.b16 %v254
      %v688 = vunpack.c.l.b16 %v255
      %v689 = vunpack.c.h.b16 %v255
      %v690 = vunpack.c.l.b16 %v256
      %v691 = vunpack.c.h.b16 %v256
      %v692 = vunpack.c.l.b16 %v257
      %v693 = vunpack.c.l.b16 %v258
      %v694 = vunpack.c.h.b16 %v258
      %v695 = vunpack.c.l.b16 %v259
      %v696 = vunpack.c.h.b16 %v259
      %v697 = vunpack.c.l.b16 %v260
      %v698 = vunpack.c.h.b16 %v260
      %v699 = vunpack.c.l.b16 %v261
      %v700 = vunpack.c.l.b16 %v262
      %v701 = vunpack.c.h.b16 %v262
      %v702 = vunpack.c.l.b16 %v263
      %v703 = vunpack.c.h.b16 %v263
      %v704 = vunpack.c.l.b16 %v264
      %v705 = vunpack.c.h.b16 %v264
      %v706 = vunpack.c.l.b16 %v265
      %v707 = vunpack.c.l.b16 %v266
      %v708 = vunpack.c.h.b16 %v266
      %v709 = vunpack.c.l.b16 %v267
      %v710 = vunpack.c.h.b16 %v267
      %v711 = vunpack.c.l.b16 %v268
      %v712 = vunpack.c.h.b16 %v268
      %v713 = vunpack.c.l.b16 %v269
      %v714 = vunpack.c.l.b16 %v270
      %v715 = vunpack.c.h.b16 %v270
      %v716 = vunpack.c.l.b16 %v271
      %v717 = vunpack.c.h.b16 %v271
      %v718 = vunpack.c.l.b16 %v272
      %v719 = vunpack.c.h.b16 %v272
      %v720 = vunpack.c.l.b16 %v273
      %v721 = vunpack.c.l.b16 %v274
      %v722 = vunpack.c.h.b16 %v274
      %v723 = vunpack.c.l.b16 %v275
      %v724 = vunpack.c.h.b16 %v275
      %v725 = vunpack.c.l.b16 %v276
      %v726 = vunpack.c.h.b16 %v276
      %v727 = vunpack.c.l.b16 %v277
      %v728 = vunpack.c.l.b16 %v278
      %v729 = vunpack.c.h.b16 %v278
      %v730 = vunpack.c.l.b16 %v279
      %v731 = vunpack.c.h.b16 %v279
      %v732 = vunpack.c.l.b16 %v280
      %v733 = vunpack.c.h.b16 %v280
      %v734 = vunpack.c.l.b16 %v281
      %v735 = vunpack.c.l.b16 %v282
      %v736 = vunpack.c.h.b16 %v282
      %v737 = vunpack.c.l.b16 %v283
      %v738 = vunpack.c.h.b16 %v283
      %v739 = vunpack.c.l.b16 %v284
      %v740 = vunpack.c.h.b16 %v284
      %v741 = vunpack.c.l.b16 %v285
      %v742 = vunpack.c.l.b16 %v286
      %v743 = vunpack.c.h.b16 %v286
      %v744 = vunpack.c.l.b16 %v287
      %v745 = vunpack.c.h.b16 %v287
      %v746 = vunpack.c.l.b16 %v288
      %v747 = vunpack.c.h.b16 %v288
      %v748 = vunpack.c.l.b16 %v289
      %v749 = vunpack.c.l.b16 %v290
      %v750 = vunpack.c.h.b16 %v290
      %v751 = vunpack.c.l.b16 %v291
      %v752 = vunpack.c.h.b16 %v291
      %v753 = vunpack.c.l.b16 %v292
      %v754 = vunpack.c.h.b16 %v292
      %v755 = vunpack.c.l.b16 %v293
      %v756 = vunpack.c.l.b16 %v294
      %v757 = vunpack.c.h.b16 %v294
      %v758 = vunpack.c.l.b16 %v295
      %v759 = vunpack.c.h.b16 %v295
      %v760 = vunpack.c.l.b16 %v296
      %v761 = vunpack.c.h.b16 %v296
      %v762 = vunpack.c.l.b16 %v297
      %v763 = vunpack.c.l.b16 %v298
      %v764 = vunpack.c.h.b16 %v298
      %v765 = vunpack.c.l.b16 %v299
      %v766 = vunpack.c.h.b16 %v299
      %v767 = vunpack.c.l.b16 %v300
      %v768 = vunpack.c.h.b16 %v300
      %v769 = vunpack.c.l.b16 %v301
      %v770 = vunpack.c.l.b16 %v302
      %v771 = vunpack.c.h.b16 %v302
      %v772 = vunpack.c.l.b16 %v303
      %v773 = vunpack.c.h.b16 %v303
      %v774 = vunpack.c.l.b16 %v304
      %v775 = vunpack.c.h.b16 %v304
      %v776 = vunpack.c.l.b16 %v305
      %v777 = vpack.c.b16 %v560, %v553
      %v778 = vpack.c.b16 %v561, %v554
      %v779 = vpack.c.b16 %v562, %v555
      %v780 = vpack.c.b16 %v563, %v556
      %v781 = vpack.c.b16 %v564, %v557
      %v782 = vpack.c.b16 %v565, %v558
      %v783 = vpack.c.b16 %v566, %v559
      %v784 = vpack.c.b16 %v574, %v567
      %v785 = vpack.c.b16 %v575, %v568
      %v786 = vpack.c.b16 %v576, %v569
      %v787 = vpack.c.b16 %v577, %v570
      %v788 = vpack.c.b16 %v578, %v571
      %v789 = vpack.c.b16 %v579, %v572
      %v790 = vpack.c.b16 %v580, %v573
      %v791 = vpack.c.b16 %v588, %v581
      %v792 = vpack.c.b16 %v589, %v582
      %v793 = vpack.c.b16 %v590, %v583
      %v794 = vpack.c.b16 %v591, %v584
      %v795 = vpack.c.b16 %v592, %v585
      %v796 = vpack.c.b16 %v593, %v586
      %v797 = vpack.c.b16 %v594, %v587
      %v798 = vpack.c.b16 %v602, %v595
      %v799 = vpack.c.b16 %v603, %v596
      %v800 = vpack.c.b16 %v604, %v597
      %v801 = vpack.c.b16 %v605, %v598
      %v802 = vpack.c.b16 %v606, %v599
      %v803 = vpack.c.b16 %v607, %v600
      %v804 = vpack.c.b16 %v608, %v601
      %v805 = vpack.c.b16 %v616, %v609
      %v806 = vpack.c.b16 %v617, %v610
      %v807 = vpack.c.b16 %v618, %v611
      %v808 = vpack.c.b16 %v619, %v612
      %v809 = vpack.c.b16 %v620, %v613
      %v810 = vpack.c.b16 %v621, %v614
      %v811 = vpack.c.b16 %v622, %v615
      %v812 = vpack.c.b16 %v630, %v623
      %v813 = vpack.c.b16 %v631, %v624
      %v814 = vpack.c.b16 %v632, %v625
      %v815 = vpack.c.b16 %v633, %v626
      %v816 = vpack.c.b16 %v634, %v627
      %v817 = vpack.c.b16 %v635, %v628
      %v818 = vpack.c.b16 %v636, %v629
      %v819 = vpack.c.b16 %v644, %v637
      %v820 = vpack.c.b16 %v645, %v638
      %v821 = vpack.c.b16 %v646, %v639
      %v822 = vpack.c.b16 %v647, %v640
      %v823 = vpack.c.b16 %v648, %v641
      %v824 = vpack.c.b16 %v649, %v642
      %v825 = vpack.c.b16 %v650, %v643
      %v826 = vpack.c.b16 %v658, %v651
      %v827 = vpack.c.b16 %v659, %v652
      %v828 = vpack.c.b16 %v660, %v653
      %v829 = vpack.c.b16 %v661, %v654
      %v830 = vpack.c.b16 %v662, %v655
      %v831 = vpack.c.b16 %v663, %v656
      %v832 = vpack.c.b16 %v664, %v657
      %v833 = vpack.c.b16 %v672, %v665
      %v834 = vpack.c.b16 %v673, %v666
      %v835 = vpack.c.b16 %v674, %v667
      %v836 = vpack.c.b16 %v675, %v668
      %v837 = vpack.c.b16 %v676, %v669
      %v838 = vpack.c.b16 %v677, %v670
      %v839 = vpack.c.b16 %v678, %v671
      %v840 = vpack.c.b16 %v686, %v679
      %v841 = vpack.c.b16 %v687, %v680
      %v842 = vpack.c.b16 %v688, %v681
      %v843 = vpack.c.b16 %v689, %v682
      %v844 = vpack.c.b16 %v690, %v683
      %v845 = vpack.c.b16 %v691, %v684
      %v846 = vpack.c.b16 %v692, %v685
      %v847 = vpack.c.b16 %v700, %v693
      %v848 = vpack.c.b16 %v701, %v694
      %v849 = vpack.c.b16 %v702, %v695
      %v850 = vpack.c.b16 %v703, %v696
      %v851 = vpack.c.b16 %v704, %v697
      %v852 = vpack.c.b16 %v705, %v698
      %v853 = vpack.c.b16 %v706, %v699
      %v854 = vpack.c.b16 %v714, %v707
      %v855 = vpack.c.b16 %v715, %v708
      %v856 = vpack.c.b16 %v716, %v709
      %v857 = vpack.c.b16 %v717, %v710
      %v858 = vpack.c.b16 %v718, %v711
      %v859 = vpack.c.b16 %v719, %v712
      %v860 = vpack.c.b16 %v720, %v713
      %v861 = vpack.c.b16 %v728, %v721
      %v862 = vpack.c.b16 %v729, %v722
      %v863 = vpack.c.b16 %v730, %v723
      %v864 = vpack.c.b16 %v731, %v724
      %v865 = vpack.c.b16 %v732, %v725
      %v866 = vpack.c.b16 %v733, %v726
      %v867 = vpack.c.b16 %v734, %v727
      %v868 = vpack.c.b16 %v742, %v735
      %v869 = vpack.c.b16 %v743, %v736
      %v870 = vpack.c.b16 %v744, %v737
      %v871 = vpack.c.b16 %v745, %v738
      %v872 = vpack.c.b16 %v746, %v739
      %v873 = vpack.c.b16 %v747, %v740
      %v874 = vpack.c.b16 %v748, %v741
      %v875 = vpack.c.b16 %v756, %v749
      %v876 = vpack.c.b16 %v757, %v750
      %v877 = vpack.c.b16 %v758, %v751
      %v878 = vpack.c.b16 %v759, %v752
      %v879 = vpack.c.b16 %v760, %v753
      %v880 = vpack.c.b16 %v761, %v754
      %v881 = vpack.c.b16 %v762, %v755
      %v882 = vpack.c.b16 %v770, %v763
      %v883 = vpack.c.b16 %v771, %v764
      %v884 = vpack.c.b16 %v772, %v765
      %v885 = vpack.c.b16 %v773, %v766
      %v886 = vpack.c.b16 %v774, %v767
      %v887 = vpack.c.b16 %v775, %v768
      %v888 = vpack.c.b16 %v776, %v769
      %v1113 = vunpack.c.l.b16 %v306
      %v1114 = vunpack.c.l.b16 %v307
      %v1115 = vunpack.c.l.b16 %v308
      %v1116 = vunpack.c.l.b16 %v309
      %v1117 = vunpack.c.l.b16 %v310
      %v1118 = vunpack.c.l.b16 %v311
      %v1119 = vunpack.c.l.b16 %v312
      %v1120 = vunpack.c.l.b16 %v313
      %v1121 = vunpack.c.l.b16 %v314
      %v1122 = vunpack.c.l.b16 %v315
      %v1123 = vunpack.c.l.b16 %v316
      %v1124 = vunpack.c.l.b16 %v317
      %v1125 = vunpack.c.l.b16 %v318
      %v1126 = vunpack.c.l.b16 %v319
      %v1127 = vunpack.c.l.b16 %v320
      %v1128 = vunpack.c.l.b16 %v321
      %v1129 = vunpack.c.l.b16 %v322
      %v1130 = vunpack.c.l.b16 %v323
      %v1131 = vunpack.c.l.b16 %v324
      %v1132 = vunpack.c.l.b16 %v325
      %v1133 = vunpack.c.l.b16 %v326
      %v1134 = vunpack.c.l.b16 %v327
      %v1135 = vunpack.c.l.b16 %v328
      %v1136 = vunpack.c.l.b16 %v329
      %v1137 = vunpack.c.l.b16 %v330
      %v1138 = vunpack.c.l.b16 %v331
      %v1139 = vunpack.c.l.b16 %v332
      %v1140 = vunpack.c.l.b16 %v333
      %v1141 = vunpack.c.l.b16 %v334
      %v1142 = vunpack.c.l.b16 %v335
      %v1143 = vunpack.c.l.b16 %v336
      %v1144 = vunpack.c.l.b16 %v337
      %v1145 = vunpack.c.l.b16 %v338
      %v1146 = vunpack.c.l.b16 %v339
      %v1147 = vunpack.c.l.b16 %v340
      %v1148 = vunpack.c.l.b16 %v341
      %v1149 = vunpack.c.l.b16 %v342
      %v1150 = vunpack.c.l.b16 %v343
      %v1151 = vunpack.c.l.b16 %v344
      %v1152 = vunpack.c.l.b16 %v345
      %v1153 = vunpack.c.l.b16 %v346
      %v1154 = vunpack.c.l.b16 %v347
      %v1155 = vunpack.c.l.b16 %v348
      %v1156 = vunpack.c.l.b16 %v349
      %v1157 = vunpack.c.l.b16 %v350
      %v1158 = vunpack.c.l.b16 %v351
      %v1159 = vunpack.c.l.b16 %v352
      %v1160 = vunpack.c.l.b16 %v353
      %v1161 = vunpack.c.l.b16 %v354
      %v1162 = vunpack.c.l.b16 %v355
      %v1163 = vunpack.c.l.b16 %v356
      %v1164 = vunpack.c.l.b16 %v357
      %v1165 = vunpack.c.l.b16 %v358
      %v1166 = vunpack.c.l.b16 %v359
      %v1167 = vunpack.c.l.b16 %v360
      %v1168 = vunpack.c.l.b16 %v361
      %v1169 = vunpack.c.l.b16 %v362
      %v1170 = vunpack.c.l.b16 %v363
      %v1171 = vunpack.c.l.b16 %v364
      %v1172 = vunpack.c.l.b16 %v365
      %v1173 = vunpack.c.l.b16 %v366
      %v1174 = vunpack.c.l.b16 %v367
      %v1175 = vunpack.c.l.b16 %v368
      %v1176 = vunpack.c.l.b16 %v369
      %v1177 = vunpack.c.l.b16 %v370
      %v1178 = vunpack.c.l.b16 %v371
      %v1179 = vunpack.c.l.b16 %v372
      %v1180 = vunpack.c.l.b16 %v373
      %v1181 = vunpack.c.l.b16 %v374
      %v1182 = vunpack.c.l.b16 %v375
      %v1183 = vunpack.c.l.b16 %v376
      %v1184 = vunpack.c.l.b16 %v377
      %v1185 = vunpack.c.l.b16 %v378
      %v1186 = vunpack.c.l.b16 %v379
      %v1187 = vunpack.c.l.b16 %v380
      %v1188 = vunpack.c.l.b16 %v381
      %v1189 = vunpack.c.l.b16 %v382
      %v1190 = vunpack.c.l.b16 %v383
      %v1191 = vunpack.c.l.b16 %v384
      %v1192 = vunpack.c.l.b16 %v385
      %v1193 = vunpack.c.l.b16 %v386
      %v1194 = vunpack.c.l.b16 %v387
      %v1195 = vunpack.c.l.b16 %v388
      %v1196 = vunpack.c.l.b16 %v389
      %v1197 = vunpack.c.l.b16 %v390
      %v1198 = vunpack.c.l.b16 %v391
      %v1199 = vunpack.c.l.b16 %v392
      %v1200 = vunpack.c.l.b16 %v393
      %v1201 = vunpack.c.l.b16 %v394
      %v1202 = vunpack.c.l.b16 %v395
      %v1203 = vunpack.c.l.b16 %v396
      %v1204 = vunpack.c.l.b16 %v397
      %v1205 = vunpack.c.l.b16 %v398
      %v1206 = vunpack.c.l.b16 %v399
      %v1207 = vunpack.c.l.b16 %v400
      %v1208 = vunpack.c.l.b16 %v401
      %v1209 = vunpack.c.l.b16 %v402
      %v1210 = vunpack.c.l.b16 %v403
      %v1211 = vunpack.c.l.b16 %v404
      %v1212 = vunpack.c.l.b16 %v405
      %v1213 = vunpack.c.l.b16 %v406
      %v1214 = vunpack.c.l.b16 %v407
      %v1215 = vunpack.c.l.b16 %v408
      %v1216 = vunpack.c.l.b16 %v409
      %v1217 = vunpack.c.l.b16 %v410
      %v1218 = vunpack.c.l.b16 %v411
      %v1219 = vunpack.c.l.b16 %v412
      %v1220 = vunpack.c.l.b16 %v413
      %v1221 = vunpack.c.l.b16 %v414
      %v1222 = vunpack.c.l.b16 %v415
      %v1223 = vunpack.c.l.b16 %v416
      %v1224 = vunpack.c.l.b16 %v417
      %v1225 = vpack.c.b16 %v1114, %v1113
      %v1226 = vpack.c.b16 %v1116, %v1115
      %v1227 = vpack.c.b16 %v1118, %v1117
      %v1228 = vpack.c.b16 %v1120, %v1119
      %v1229 = vpack.c.b16 %v1122, %v1121
      %v1230 = vpack.c.b16 %v1124, %v1123
      %v1231 = vpack.c.b16 %v1126, %v1125
      %v1232 = vpack.c.b16 %v1128, %v1127
      %v1233 = vpack.c.b16 %v1130, %v1129
      %v1234 = vpack.c.b16 %v1132, %v1131
      %v1235 = vpack.c.b16 %v1134, %v1133
      %v1236 = vpack.c.b16 %v1136, %v1135
      %v1237 = vpack.c.b16 %v1138, %v1137
      %v1238 = vpack.c.b16 %v1140, %v1139
      %v1239 = vpack.c.b16 %v1142, %v1141
      %v1240 = vpack.c.b16 %v1144, %v1143
      %v1241 = vpack.c.b16 %v1146, %v1145
      %v1242 = vpack.c.b16 %v1148, %v1147
      %v1243 = vpack.c.b16 %v1150, %v1149
      %v1244 = vpack.c.b16 %v1152, %v1151
      %v1245 = vpack.c.b16 %v1154, %v1153
      %v1246 = vpack.c.b16 %v1156, %v1155
      %v1247 = vpack.c.b16 %v1158, %v1157
      %v1248 = vpack.c.b16 %v1160, %v1159
      %v1249 = vpack.c.b16 %v1162, %v1161
      %v1250 = vpack.c.b16 %v1164, %v1163
      %v1251 = vpack.c.b16 %v1166, %v1165
      %v1252 = vpack.c.b16 %v1168, %v1167
      %v1253 = vpack.c.b16 %v1170, %v1169
      %v1254 = vpack.c.b16 %v1172, %v1171
      %v1255 = vpack.c.b16 %v1174, %v1173
      %v1256 = vpack.c.b16 %v1176, %v1175
      %v1257 = vpack.c.b16 %v1178, %v1177
      %v1258 = vpack.c.b16 %v1180, %v1179
      %v1259 = vpack.c.b16 %v1182, %v1181
      %v1260 = vpack.c.b16 %v1184, %v1183
      %v1261 = vpack.c.b16 %v1186, %v1185
      %v1262 = vpack.c.b16 %v1188, %v1187
      %v1263 = vpack.c.b16 %v1190, %v1189
      %v1264 = vpack.c.b16 %v1192, %v1191
      %v1265 = vpack.c.b16 %v1194, %v1193
      %v1266 = vpack.c.b16 %v1196, %v1195
      %v1267 = vpack.c.b16 %v1198, %v1197
      %v1268 = vpack.c.b16 %v1200, %v1199
      %v1269 = vpack.c.b16 %v1202, %v1201
      %v1270 = vpack.c.b16 %v1204, %v1203
      %v1271 = vpack.c.b16 %v1206, %v1205
      %v1272 = vpack.c.b16 %v1208, %v1207
      %v1273 = vpack.c.b16 %v1210, %v1209
      %v1274 = vpack.c.b16 %v1212, %v1211
      %v1275 = vpack.c.b16 %v1214, %v1213
      %v1276 = vpack.c.b16 %v1216, %v1215
      %v1277 = vpack.c.b16 %v1218, %v1217
      %v1278 = vpack.c.b16 %v1220, %v1219
      %v1279 = vpack.c.b16 %v1222, %v1221
      %v1280 = vpack.c.b16 %v1224, %v1223
      %1337 = vmatprep.subr.bf16.mxu0 0
      %1338 = vmatpush1.bf16.msra.mxu0 %v1225
      %1339 = vmatprep.subr.bf16.mxu0 0
      %1340 = vmatpush1.bf16.msra.mxu0 %v1226
      %1341 = vmatprep.subr.bf16.mxu0 0
      %1342 = vmatpush1.bf16.msra.mxu0 %v1227
      %1343 = vmatprep.subr.bf16.mxu0 0
      %1344 = vmatpush1.bf16.msra.mxu0 %v1228
      %1345 = vmatprep.subr.bf16.mxu0 0
      %1346 = vmatpush1.bf16.msra.mxu0 %v1229
      %1347 = vmatprep.subr.bf16.mxu0 0
      %1348 = vmatpush1.bf16.msra.mxu0 %v1230
      %1349 = vmatprep.subr.bf16.mxu0 0
      %1350 = vmatpush1.bf16.msra.mxu0 %v1231
      %1351 = vmatprep.subr.bf16.mxu0 0
      %1352 = vmatpush1.bf16.msra.mxu0 %v1232
      %1353 = vmatprep.subr.bf16.mxu0 0
      %1354 = vmatpush1.bf16.msra.mxu0 %v1233
      %1355 = vmatprep.subr.bf16.mxu0 0
      %1356 = vmatpush1.bf16.msra.mxu0 %v1234
      %1357 = vmatprep.subr.bf16.mxu0 0
      %1358 = vmatpush1.bf16.msra.mxu0 %v1235
      %1359 = vmatprep.subr.bf16.mxu0 0
      %1360 = vmatpush1.bf16.msra.mxu0 %v1236
      %1361 = vmatprep.subr.bf16.mxu0 0
      %1362 = vmatpush1.bf16.msra.mxu0 %v1237
      %1363 = vmatprep.subr.bf16.mxu0 0
      %1364 = vmatpush1.bf16.msra.mxu0 %v1238
      %1365 = vmatprep.subr.bf16.mxu0 0
      %1366 = vmatpush1.bf16.msra.mxu0 %v1239
      %1367 = vmatprep.subr.bf16.mxu0 0
      %1368 = vmatpush1.bf16.msra.mxu0 %v1240
      %1369 = vmatprep.mubr.bf16.mxu0 %v778
      %1370 = vmatmul.mubr.bf16.gmra.mrb[0].mxu0 %v777
      %v1371 = vpop.f32.mrb[0].mxu0
      %v1372 = vadd.f32 %v423, %v1371
      %v1373 = vpop.f32.mrb[0].mxu0
      %v1374 = vpop.f32.mrb[0].mxu0
      %v1375 = vadd.f32 %v423, %v1374
      %v1376 = vpop.f32.mrb[0].mxu0
      %1377 = vmatprep.mubr.bf16.mxu0 %v785
      %1378 = vmatmul.mubr.bf16.gmra.mrb[0].mxu0 %v784
      %v1379 = vpop.f32.mrb[0].mxu0
      %v1380 = vadd.f32 %v423, %v1379
      %v1381 = vpop.f32.mrb[0].mxu0
      %v1382 = vpop.f32.mrb[0].mxu0
      %v1383 = vadd.f32 %v423, %v1382
      %v1384 = vpop.f32.mrb[0].mxu0
      %1385 = vmatprep.mubr.bf16.mxu0 %v792
      %1386 = vmatmul.mubr.bf16.gmra.mrb[0].mxu0 %v791
      %v1387 = vpop.f32.mrb[0].mxu0
      %v1388 = vadd.f32 %v423, %v1387
      %v1389 = vpop.f32.mrb[0].mxu0
      %v1390 = vpop.f32.mrb[0].mxu0
      %v1391 = vadd.f32 %v423, %v1390
      %v1392 = vpop.f32.mrb[0].mxu0
      %1393 = vmatprep.mubr.bf16.mxu0 %v799
      %1394 = vmatmul.mubr.bf16.gmra.mrb[0].mxu0 %v798
      %v1395 = vpop.f32.mrb[0].mxu0
      %v1396 = vadd.f32 %v423, %v1395
      %v1397 = vpop.f32.mrb[0].mxu0
      %v1398 = vpop.f32.mrb[0].mxu0
      %v1399 = vadd.f32 %v423, %v1398
      %v1400 = vpop.f32.mrb[0].mxu0
      %1401 = vmatprep.mubr.bf16.mxu0 %v806
      %1402 = vmatmul.mubr.bf16.gmra.mrb[0].mxu0 %v805
      %v1403 = vpop.f32.mrb[0].mxu0
      %v1404 = vadd.f32 %v423, %v1403
      %v1405 = vpop.f32.mrb[0].mxu0
      %v1406 = vpop.f32.mrb[0].mxu0
      %v1407 = vadd.f32 %v423, %v1406
      %v1408 = vpop.f32.mrb[0].mxu0
      %1409 = vmatprep.mubr.bf16.mxu0 %v813
      %1410 = vmatmul.mubr.bf16.gmra.mrb[0].mxu0 %v812
      %v1411 = vpop.f32.mrb[0].mxu0
      %v1412 = vadd.f32 %v423, %v1411
      %v1413 = vpop.f32.mrb[0].mxu0
      %v1414 = vpop.f32.mrb[0].mxu0
      %v1415 = vadd.f32 %v423, %v1414
      %v1416 = vpop.f32.mrb[0].mxu0
      %1417 = vmatprep.mubr.bf16.mxu0 %v820
      %1418 = vmatmul.mubr.bf16.gmra.mrb[0].mxu0 %v819
      %v1419 = vpop.f32.mrb[0].mxu0
      %v1420 = vadd.f32 %v423, %v1419
      %v1421 = vpop.f32.mrb[0].mxu0
      %v1422 = vpop.f32.mrb[0].mxu0
      %v1423 = vadd.f32 %v423, %v1422
      %v1424 = vpop.f32.mrb[0].mxu0
      %1425 = vmatprep.mubr.bf16.mxu0 %v827
      %1426 = vmatmul.mubr.bf16.gmra.mrb[0].mxu0 %v826
      %v1427 = vpop.f32.mrb[0].mxu0
      %v1428 = vadd.f32 %v423, %v1427
      %v1429 = vpop.f32.mrb[0].mxu0
      %v1430 = vpop.f32.mrb[0].mxu0
      %v1431 = vadd.f32 %v423, %v1430
      %v1432 = vpop.f32.mrb[0].mxu0
      %1433 = vmatprep.mubr.bf16.mxu0 %v834
      %1434 = vmatmul.mubr.bf16.gmra.mrb[0].mxu0 %v833
      %v1435 = vpop.f32.mrb[0].mxu0
      %v1436 = vadd.f32 %v423, %v1435
      %v1437 = vpop.f32.mrb[0].mxu0
      %v1438 = vpop.f32.mrb[0].mxu0
      %v1439 = vadd.f32 %v423, %v1438
      %v1440 = vpop.f32.mrb[0].mxu0
      %1441 = vmatprep.mubr.bf16.mxu0 %v841
      %1442 = vmatmul.mubr.bf16.gmra.mrb[0].mxu0 %v840
      %v1443 = vpop.f32.mrb[0].mxu0
      %v1444 = vadd.f32 %v423, %v1443
      %v1445 = vpop.f32.mrb[0].mxu0
      %v1446 = vpop.f32.mrb[0].mxu0
      %v1447 = vadd.f32 %v423, %v1446
      %v1448 = vpop.f32.mrb[0].mxu0
      %1449 = vmatprep.mubr.bf16.mxu0 %v848
      %1450 = vmatmul.mubr.bf16.gmra.mrb[0].mxu0 %v847
      %v1451 = vpop.f32.mrb[0].mxu0
      %v1452 = vadd.f32 %v423, %v1451
      %v1453 = vpop.f32.mrb[0].mxu0
      %v1454 = vpop.f32.mrb[0].mxu0
      %v1455 = vadd.f32 %v423, %v1454
      %v1456 = vpop.f32.mrb[0].mxu0
      %1457 = vmatprep.mubr.bf16.mxu0 %v855
      %1458 = vmatmul.mubr.bf16.gmra.mrb[0].mxu0 %v854
      %v1459 = vpop.f32.mrb[0].mxu0
      %v1460 = vadd.f32 %v423, %v1459
      %v1461 = vpop.f32.mrb[0].mxu0
      %v1462 = vpop.f32.mrb[0].mxu0
      %v1463 = vadd.f32 %v423, %v1462
      %v1464 = vpop.f32.mrb[0].mxu0
      %1465 = vmatprep.mubr.bf16.mxu0 %v862
      %1466 = vmatmul.mubr.bf16.gmra.mrb[0].mxu0 %v861
      %v1467 = vpop.f32.mrb[0].mxu0
      %v1468 = vadd.f32 %v423, %v1467
      %v1469 = vpop.f32.mrb[0].mxu0
      %v1470 = vpop.f32.mrb[0].mxu0
      %v1471 = vadd.f32 %v423, %v1470
      %v1472 = vpop.f32.mrb[0].mxu0
      %1473 = vmatprep.mubr.bf16.mxu0 %v869
      %1474 = vmatmul.mubr.bf16.gmra.mrb[0].mxu0 %v868
      %v1475 = vpop.f32.mrb[0].mxu0
      %v1476 = vadd.f32 %v423, %v1475
      %v1477 = vpop.f32.mrb[0].mxu0
      %v1478 = vpop.f32.mrb[0].mxu0
      %v1479 = vadd.f32 %v423, %v1478
      %v1480 = vpop.f32.mrb[0].mxu0
      %1481 = vmatprep.mubr.bf16.mxu0 %v876
      %1482 = vmatmul.mubr.bf16.gmra.mrb[0].mxu0 %v875
      %v1483 = vpop.f32.mrb[0].mxu0
      %v1484 = vadd.f32 %v423, %v1483
      %v1485 = vpop.f32.mrb[0].mxu0
      %v1486 = vpop.f32.mrb[0].mxu0
      %v1487 = vadd.f32 %v423, %v1486
      %v1488 = vpop.f32.mrb[0].mxu0
      %1489 = vmatprep.mubr.bf16.mxu0 %v883
      %1490 = vmatmul.mubr.bf16.gmra.mrb[0].mxu0 %v882
      %v1491 = vpop.f32.mrb[0].mxu0
      %v1492 = vadd.f32 %v423, %v1491
      %v1493 = vpop.f32.mrb[0].mxu0
      %v1494 = vpop.f32.mrb[0].mxu0
      %v1495 = vadd.f32 %v423, %v1494
      %v1496 = vpop.f32.mrb[0].mxu0
      %1497 = vdwg.mxu0
      %1498 = vmatprep.subr.bf16.mxu0 0
      %1499 = vmatpush1.bf16.msra.mxu0 %v1241
      %1500 = vmatprep.subr.bf16.mxu0 0
      %1501 = vmatpush1.bf16.msra.mxu0 %v1242
      %1502 = vmatprep.subr.bf16.mxu0 0
      %1503 = vmatpush1.bf16.msra.mxu0 %v1243
      %1504 = vmatprep.subr.bf16.mxu0 0
      %1505 = vmatpush1.bf16.msra.mxu0 %v1244
      %1506 = vmatprep.subr.bf16.mxu0 0
      %1507 = vmatpush1.bf16.msra.mxu0 %v1245
      %1508 = vmatprep.subr.bf16.mxu0 0
      %1509 = vmatpush1.bf16.msra.mxu0 %v1246
      %1510 = vmatprep.subr.bf16.mxu0 0
      %1511 = vmatpush1.bf16.msra.mxu0 %v1247
      %1512 = vmatprep.subr.bf16.mxu0 0
      %1513 = vmatpush1.bf16.msra.mxu0 %v1248
      %1514 = vmatprep.subr.bf16.mxu0 0
      %1515 = vmatpush1.bf16.msra.mxu0 %v1249
      %1516 = vmatprep.subr.bf16.mxu0 0
      %1517 = vmatpush1.bf16.msra.mxu0 %v1250
      %1518 = vmatprep.subr.bf16.mxu0 0
      %1519 = vmatpush1.bf16.msra.mxu0 %v1251
      %1520 = vmatprep.subr.bf16.mxu0 0
      %1521 = vmatpush1.bf16.msra.mxu0 %v1252
      %1522 = vmatprep.subr.bf16.mxu0 0
      %1523 = vmatpush1.bf16.msra.mxu0 %v1253
      %1524 = vmatprep.subr.bf16.mxu0 0
      %1525 = vmatpush1.bf16.msra.mxu0 %v1254
      %1526 = vmatprep.subr.bf16.mxu0 0
      %1527 = vmatpush1.bf16.msra.mxu0 %v1255
      %1528 = vmatprep.subr.bf16.mxu0 0
      %1529 = vmatpush1.bf16.msra.mxu0 %v1256
      %1530 = vmatprep.mubr.bf16.mxu0 %v780
      %1531 = vmatmul.mubr.bf16.gmra.mrb[0].mxu0 %v779
      %v1532 = vpop.f32.mrb[0].mxu0
      %v1533 = vadd.f32 %v1372, %v1532
      %v1534 = vpop.f32.mrb[0].mxu0
      %v1535 = vpop.f32.mrb[0].mxu0
      %v1536 = vadd.f32 %v1375, %v1535
      %v1537 = vpop.f32.mrb[0].mxu0
      %1538 = vmatprep.mubr.bf16.mxu0 %v787
      %1539 = vmatmul.mubr.bf16.gmra.mrb[0].mxu0 %v786
      %v1540 = vpop.f32.mrb[0].mxu0
      %v1541 = vadd.f32 %v1380, %v1540
      %v1542 = vpop.f32.mrb[0].mxu0
      %v1543 = vpop.f32.mrb[0].mxu0
      %v1544 = vadd.f32 %v1383, %v1543
      %v1545 = vpop.f32.mrb[0].mxu0
      %1546 = vmatprep.mubr.bf16.mxu0 %v794
      %1547 = vmatmul.mubr.bf16.gmra.mrb[0].mxu0 %v793
      %v1548 = vpop.f32.mrb[0].mxu0
      %v1549 = vadd.f32 %v1388, %v1548
      %v1550 = vpop.f32.mrb[0].mxu0
      %v1551 = vpop.f32.mrb[0].mxu0
      %v1552 = vadd.f32 %v1391, %v1551
      %v1553 = vpop.f32.mrb[0].mxu0
      %1554 = vmatprep.mubr.bf16.mxu0 %v801
      %1555 = vmatmul.mubr.bf16.gmra.mrb[0].mxu0 %v800
      %v1556 = vpop.f32.mrb[0].mxu0
      %v1557 = vadd.f32 %v1396, %v1556
      %v1558 = vpop.f32.mrb[0].mxu0
      %v1559 = vpop.f32.mrb[0].mxu0
      %v1560 = vadd.f32 %v1399, %v1559
      %v1561 = vpop.f32.mrb[0].mxu0
      %1562 = vmatprep.mubr.bf16.mxu0 %v808
      %1563 = vmatmul.mubr.bf16.gmra.mrb[0].mxu0 %v807
      %v1564 = vpop.f32.mrb[0].mxu0
      %v1565 = vadd.f32 %v1404, %v1564
      %v1566 = vpop.f32.mrb[0].mxu0
      %v1567 = vpop.f32.mrb[0].mxu0
      %v1568 = vadd.f32 %v1407, %v1567
      %v1569 = vpop.f32.mrb[0].mxu0
      %1570 = vmatprep.mubr.bf16.mxu0 %v815
      %1571 = vmatmul.mubr.bf16.gmra.mrb[0].mxu0 %v814
      %v1572 = vpop.f32.mrb[0].mxu0
      %v1573 = vadd.f32 %v1412, %v1572
      %v1574 = vpop.f32.mrb[0].mxu0
      %v1575 = vpop.f32.mrb[0].mxu0
      %v1576 = vadd.f32 %v1415, %v1575
      %v1577 = vpop.f32.mrb[0].mxu0
      %1578 = vmatprep.mubr.bf16.mxu0 %v822
      %1579 = vmatmul.mubr.bf16.gmra.mrb[0].mxu0 %v821
      %v1580 = vpop.f32.mrb[0].mxu0
      %v1581 = vadd.f32 %v1420, %v1580
      %v1582 = vpop.f32.mrb[0].mxu0
      %v1583 = vpop.f32.mrb[0].mxu0
      %v1584 = vadd.f32 %v1423, %v1583
      %v1585 = vpop.f32.mrb[0].mxu0
      %1586 = vmatprep.mubr.bf16.mxu0 %v829
      %1587 = vmatmul.mubr.bf16.gmra.mrb[0].mxu0 %v828
      %v1588 = vpop.f32.mrb[0].mxu0
      %v1589 = vadd.f32 %v1428, %v1588
      %v1590 = vpop.f32.mrb[0].mxu0
      %v1591 = vpop.f32.mrb[0].mxu0
      %v1592 = vadd.f32 %v1431, %v1591
      %v1593 = vpop.f32.mrb[0].mxu0
      %1594 = vmatprep.mubr.bf16.mxu0 %v836
      %1595 = vmatmul.mubr.bf16.gmra.mrb[0].mxu0 %v835
      %v1596 = vpop.f32.mrb[0].mxu0
      %v1597 = vadd.f32 %v1436, %v1596
      %v1598 = vpop.f32.mrb[0].mxu0
      %v1599 = vpop.f32.mrb[0].mxu0
      %v1600 = vadd.f32 %v1439, %v1599
      %v1601 = vpop.f32.mrb[0].mxu0
      %1602 = vmatprep.mubr.bf16.mxu0 %v843
      %1603 = vmatmul.mubr.bf16.gmra.mrb[0].mxu0 %v842
      %v1604 = vpop.f32.mrb[0].mxu0
      %v1605 = vadd.f32 %v1444, %v1604
      %v1606 = vpop.f32.mrb[0].mxu0
      %v1607 = vpop.f32.mrb[0].mxu0
      %v1608 = vadd.f32 %v1447, %v1607
      %v1609 = vpop.f32.mrb[0].mxu0
      %1610 = vmatprep.mubr.bf16.mxu0 %v850
      %1611 = vmatmul.mubr.bf16.gmra.mrb[0].mxu0 %v849
      %v1612 = vpop.f32.mrb[0].mxu0
      %v1613 = vadd.f32 %v1452, %v1612
      %v1614 = vpop.f32.mrb[0].mxu0
      %v1615 = vpop.f32.mrb[0].mxu0
      %v1616 = vadd.f32 %v1455, %v1615
      %v1617 = vpop.f32.mrb[0].mxu0
      %1618 = vmatprep.mubr.bf16.mxu0 %v857
      %1619 = vmatmul.mubr.bf16.gmra.mrb[0].mxu0 %v856
      %v1620 = vpop.f32.mrb[0].mxu0
      %v1621 = vadd.f32 %v1460, %v1620
      %v1622 = vpop.f32.mrb[0].mxu0
      %v1623 = vpop.f32.mrb[0].mxu0
      %v1624 = vadd.f32 %v1463, %v1623
      %v1625 = vpop.f32.mrb[0].mxu0
      %1626 = vmatprep.mubr.bf16.mxu0 %v864
      %1627 = vmatmul.mubr.bf16.gmra.mrb[0].mxu0 %v863
      %v1628 = vpop.f32.mrb[0].mxu0
      %v1629 = vadd.f32 %v1468, %v1628
      %v1630 = vpop.f32.mrb[0].mxu0
      %v1631 = vpop.f32.mrb[0].mxu0
      %v1632 = vadd.f32 %v1471, %v1631
      %v1633 = vpop.f32.mrb[0].mxu0
      %1634 = vmatprep.mubr.bf16.mxu0 %v871
      %1635 = vmatmul.mubr.bf16.gmra.mrb[0].mxu0 %v870
      %v1636 = vpop.f32.mrb[0].mxu0
      %v1637 = vadd.f32 %v1476, %v1636
      %v1638 = vpop.f32.mrb[0].mxu0
      %v1639 = vpop.f32.mrb[0].mxu0
      %v1640 = vadd.f32 %v1479, %v1639
      %v1641 = vpop.f32.mrb[0].mxu0
      %1642 = vmatprep.mubr.bf16.mxu0 %v878
      %1643 = vmatmul.mubr.bf16.gmra.mrb[0].mxu0 %v877
      %v1644 = vpop.f32.mrb[0].mxu0
      %v1645 = vadd.f32 %v1484, %v1644
      %v1646 = vpop.f32.mrb[0].mxu0
      %v1647 = vpop.f32.mrb[0].mxu0
      %v1648 = vadd.f32 %v1487, %v1647
      %v1649 = vpop.f32.mrb[0].mxu0
      %1650 = vmatprep.mubr.bf16.mxu0 %v885
      %1651 = vmatmul.mubr.bf16.gmra.mrb[0].mxu0 %v884
      %v1652 = vpop.f32.mrb[0].mxu0
      %v1653 = vadd.f32 %v1492, %v1652
      %v1654 = vpop.f32.mrb[0].mxu0
      %v1655 = vpop.f32.mrb[0].mxu0
      %v1656 = vadd.f32 %v1495, %v1655
      %v1657 = vpop.f32.mrb[0].mxu0
      %1658 = vdwg.mxu0
      %1659 = vmatprep.subr.bf16.mxu0 0
      %1660 = vmatpush1.bf16.msra.mxu0 %v1257
      %1661 = vmatprep.subr.bf16.mxu0 0
      %1662 = vmatpush1.bf16.msra.mxu0 %v1258
      %1663 = vmatprep.subr.bf16.mxu0 0
      %1664 = vmatpush1.bf16.msra.mxu0 %v1259
      %1665 = vmatprep.subr.bf16.mxu0 0
      %1666 = vmatpush1.bf16.msra.mxu0 %v1260
      %1667 = vmatprep.subr.bf16.mxu0 0
      %1668 = vmatpush1.bf16.msra.mxu0 %v1261
      %1669 = vmatprep.subr.bf16.mxu0 0
      %1670 = vmatpush1.bf16.msra.mxu0 %v1262
      %1671 = vmatprep.subr.bf16.mxu0 0
      %1672 = vmatpush1.bf16.msra.mxu0 %v1263
      %1673 = vmatprep.subr.bf16.mxu0 0
      %1674 = vmatpush1.bf16.msra.mxu0 %v1264
      %1675 = vmatprep.subr.bf16.mxu0 0
      %1676 = vmatpush1.bf16.msra.mxu0 %v1265
      %1677 = vmatprep.subr.bf16.mxu0 0
      %1678 = vmatpush1.bf16.msra.mxu0 %v1266
      %1679 = vmatprep.subr.bf16.mxu0 0
      %1680 = vmatpush1.bf16.msra.mxu0 %v1267
      %1681 = vmatprep.subr.bf16.mxu0 0
      %1682 = vmatpush1.bf16.msra.mxu0 %v1268
      %1683 = vmatprep.subr.bf16.mxu0 0
      %1684 = vmatpush1.bf16.msra.mxu0 %v1269
      %1685 = vmatprep.subr.bf16.mxu0 0
      %1686 = vmatpush1.bf16.msra.mxu0 %v1270
      %1687 = vmatprep.subr.bf16.mxu0 0
      %1688 = vmatpush1.bf16.msra.mxu0 %v1271
      %1689 = vmatprep.subr.bf16.mxu0 0
      %1690 = vmatpush1.bf16.msra.mxu0 %v1272
      %1691 = vmatprep.mubr.bf16.mxu0 %v782
      %1692 = vmatmul.mubr.bf16.gmra.mrb[0].mxu0 %v781
      %v1693 = vpop.f32.mrb[0].mxu0
      %v1694 = vadd.f32 %v1533, %v1693
      %v1695 = vpop.f32.mrb[0].mxu0
      %v1696 = vpop.f32.mrb[0].mxu0
      %v1697 = vadd.f32 %v1536, %v1696
      %v1698 = vpop.f32.mrb[0].mxu0
      %1699 = vmatprep.mubr.bf16.mxu0 %v789
      %1700 = vmatmul.mubr.bf16.gmra.mrb[0].mxu0 %v788
      %v1701 = vpop.f32.mrb[0].mxu0
      %v1702 = vadd.f32 %v1541, %v1701
      %v1703 = vpop.f32.mrb[0].mxu0
      %v1704 = vpop.f32.mrb[0].mxu0
      %v1705 = vadd.f32 %v1544, %v1704
      %v1706 = vpop.f32.mrb[0].mxu0
      %1707 = vmatprep.mubr.bf16.mxu0 %v796
      %1708 = vmatmul.mubr.bf16.gmra.mrb[0].mxu0 %v795
      %v1709 = vpop.f32.mrb[0].mxu0
      %v1710 = vadd.f32 %v1549, %v1709
      %v1711 = vpop.f32.mrb[0].mxu0
      %v1712 = vpop.f32.mrb[0].mxu0
      %v1713 = vadd.f32 %v1552, %v1712
      %v1714 = vpop.f32.mrb[0].mxu0
      %1715 = vmatprep.mubr.bf16.mxu0 %v803
      %1716 = vmatmul.mubr.bf16.gmra.mrb[0].mxu0 %v802
      %v1717 = vpop.f32.mrb[0].mxu0
      %v1718 = vadd.f32 %v1557, %v1717
      %v1719 = vpop.f32.mrb[0].mxu0
      %v1720 = vpop.f32.mrb[0].mxu0
      %v1721 = vadd.f32 %v1560, %v1720
      %v1722 = vpop.f32.mrb[0].mxu0
      %1723 = vmatprep.mubr.bf16.mxu0 %v810
      %1724 = vmatmul.mubr.bf16.gmra.mrb[0].mxu0 %v809
      %v1725 = vpop.f32.mrb[0].mxu0
      %v1726 = vadd.f32 %v1565, %v1725
      %v1727 = vpop.f32.mrb[0].mxu0
      %v1728 = vpop.f32.mrb[0].mxu0
      %v1729 = vadd.f32 %v1568, %v1728
      %v1730 = vpop.f32.mrb[0].mxu0
      %1731 = vmatprep.mubr.bf16.mxu0 %v817
      %1732 = vmatmul.mubr.bf16.gmra.mrb[0].mxu0 %v816
      %v1733 = vpop.f32.mrb[0].mxu0
      %v1734 = vadd.f32 %v1573, %v1733
      %v1735 = vpop.f32.mrb[0].mxu0
      %v1736 = vpop.f32.mrb[0].mxu0
      %v1737 = vadd.f32 %v1576, %v1736
      %v1738 = vpop.f32.mrb[0].mxu0
      %1739 = vmatprep.mubr.bf16.mxu0 %v824
      %1740 = vmatmul.mubr.bf16.gmra.mrb[0].mxu0 %v823
      %v1741 = vpop.f32.mrb[0].mxu0
      %v1742 = vadd.f32 %v1581, %v1741
      %v1743 = vpop.f32.mrb[0].mxu0
      %v1744 = vpop.f32.mrb[0].mxu0
      %v1745 = vadd.f32 %v1584, %v1744
      %v1746 = vpop.f32.mrb[0].mxu0
      %1747 = vmatprep.mubr.bf16.mxu0 %v831
      %1748 = vmatmul.mubr.bf16.gmra.mrb[0].mxu0 %v830
      %v1749 = vpop.f32.mrb[0].mxu0
      %v1750 = vadd.f32 %v1589, %v1749
      %v1751 = vpop.f32.mrb[0].mxu0
      %v1752 = vpop.f32.mrb[0].mxu0
      %v1753 = vadd.f32 %v1592, %v1752
      %v1754 = vpop.f32.mrb[0].mxu0
      %1755 = vmatprep.mubr.bf16.mxu0 %v838
      %1756 = vmatmul.mubr.bf16.gmra.mrb[0].mxu0 %v837
      %v1757 = vpop.f32.mrb[0].mxu0
      %v1758 = vadd.f32 %v1597, %v1757
      %v1759 = vpop.f32.mrb[0].mxu0
      %v1760 = vpop.f32.mrb[0].mxu0
      %v1761 = vadd.f32 %v1600, %v1760
      %v1762 = vpop.f32.mrb[0].mxu0
      %1763 = vmatprep.mubr.bf16.mxu0 %v845
      %1764 = vmatmul.mubr.bf16.gmra.mrb[0].mxu0 %v844
      %v1765 = vpop.f32.mrb[0].mxu0
      %v1766 = vadd.f32 %v1605, %v1765
      %v1767 = vpop.f32.mrb[0].mxu0
      %v1768 = vpop.f32.mrb[0].mxu0
      %v1769 = vadd.f32 %v1608, %v1768
      %v1770 = vpop.f32.mrb[0].mxu0
      %1771 = vmatprep.mubr.bf16.mxu0 %v852
      %1772 = vmatmul.mubr.bf16.gmra.mrb[0].mxu0 %v851
      %v1773 = vpop.f32.mrb[0].mxu0
      %v1774 = vadd.f32 %v1613, %v1773
      %v1775 = vpop.f32.mrb[0].mxu0
      %v1776 = vpop.f32.mrb[0].mxu0
      %v1777 = vadd.f32 %v1616, %v1776
      %v1778 = vpop.f32.mrb[0].mxu0
      %1779 = vmatprep.mubr.bf16.mxu0 %v859
      %1780 = vmatmul.mubr.bf16.gmra.mrb[0].mxu0 %v858
      %v1781 = vpop.f32.mrb[0].mxu0
      %v1782 = vadd.f32 %v1621, %v1781
      %v1783 = vpop.f32.mrb[0].mxu0
      %v1784 = vpop.f32.mrb[0].mxu0
      %v1785 = vadd.f32 %v1624, %v1784
      %v1786 = vpop.f32.mrb[0].mxu0
      %1787 = vmatprep.mubr.bf16.mxu0 %v866
      %1788 = vmatmul.mubr.bf16.gmra.mrb[0].mxu0 %v865
      %v1789 = vpop.f32.mrb[0].mxu0
      %v1790 = vadd.f32 %v1629, %v1789
      %v1791 = vpop.f32.mrb[0].mxu0
      %v1792 = vpop.f32.mrb[0].mxu0
      %v1793 = vadd.f32 %v1632, %v1792
      %v1794 = vpop.f32.mrb[0].mxu0
      %1795 = vmatprep.mubr.bf16.mxu0 %v873
      %1796 = vmatmul.mubr.bf16.gmra.mrb[0].mxu0 %v872
      %v1797 = vpop.f32.mrb[0].mxu0
      %v1798 = vadd.f32 %v1637, %v1797
      %v1799 = vpop.f32.mrb[0].mxu0
      %v1800 = vpop.f32.mrb[0].mxu0
      %v1801 = vadd.f32 %v1640, %v1800
      %v1802 = vpop.f32.mrb[0].mxu0
      %1803 = vmatprep.mubr.bf16.mxu0 %v880
      %1804 = vmatmul.mubr.bf16.gmra.mrb[0].mxu0 %v879
      %v1805 = vpop.f32.mrb[0].mxu0
      %v1806 = vadd.f32 %v1645, %v1805
      %v1807 = vpop.f32.mrb[0].mxu0
      %v1808 = vpop.f32.mrb[0].mxu0
      %v1809 = vadd.f32 %v1648, %v1808
      %v1810 = vpop.f32.mrb[0].mxu0
      %1811 = vmatprep.mubr.bf16.mxu0 %v887
      %1812 = vmatmul.mubr.bf16.gmra.mrb[0].mxu0 %v886
      %v1813 = vpop.f32.mrb[0].mxu0
      %v1814 = vadd.f32 %v1653, %v1813
      %v1815 = vpop.f32.mrb[0].mxu0
      %v1816 = vpop.f32.mrb[0].mxu0
      %v1817 = vadd.f32 %v1656, %v1816
      %v1818 = vpop.f32.mrb[0].mxu0
      %1819 = vdwg.mxu0
      %1820 = vmatprep.subr.bf16.mxu0 0
      %1821 = vmatpush1.bf16.msra.mxu0 %v1273
      %1822 = vmatprep.subr.bf16.mxu0 0
      %1823 = vmatpush1.bf16.msra.mxu0 %v1274
      %1824 = vmatprep.subr.bf16.mxu0 0
      %1825 = vmatpush1.bf16.msra.mxu0 %v1275
      %1826 = vmatprep.subr.bf16.mxu0 0
      %1827 = vmatpush1.bf16.msra.mxu0 %v1276
      %1828 = vmatprep.subr.bf16.mxu0 0
      %1829 = vmatpush1.bf16.msra.mxu0 %v1277
      %1830 = vmatprep.subr.bf16.mxu0 0
      %1831 = vmatpush1.bf16.msra.mxu0 %v1278
      %1832 = vmatprep.subr.bf16.mxu0 0
      %1833 = vmatpush1.bf16.msra.mxu0 %v1279
      %1834 = vmatprep.subr.bf16.mxu0 0
      %1835 = vmatpush1.bf16.msra.mxu0 %v1280
      %1836 = vmatprep.subr.bf16.mxu0 0
      %1837 = vmatpush1.bf16.msra.mxu0 0
      %1838 = vmatprep.subr.bf16.mxu0 0
      %1839 = vmatpush1.bf16.msra.mxu0 0
      %1840 = vmatprep.subr.bf16.mxu0 0
      %1841 = vmatpush1.bf16.msra.mxu0 0
      %1842 = vmatprep.subr.bf16.mxu0 0
      %1843 = vmatpush1.bf16.msra.mxu0 0
      %1844 = vmatprep.subr.bf16.mxu0 0
      %1845 = vmatpush1.bf16.msra.mxu0 0
      %1846 = vmatprep.subr.bf16.mxu0 0
      %1847 = vmatpush1.bf16.msra.mxu0 0
      %1848 = vmatprep.subr.bf16.mxu0 0
      %1849 = vmatpush1.bf16.msra.mxu0 0
      %1850 = vmatprep.subr.bf16.mxu0 0
      %1851 = vmatpush1.bf16.msra.mxu0 0
      %1852 = vmatprep.mubr.bf16.mxu0 0
      %1853 = vmatmul.mubr.bf16.gmra.mrb[0].mxu0 %v783
      %v1854 = vpop.f32.mrb[0].mxu0
      %v1855 = vadd.f32 %v1694, %v1854
      %v1856 = vpop.f32.mrb[0].mxu0
      %v1857 = vpop.f32.mrb[0].mxu0
      %v1858 = vadd.f32 %v1697, %v1857
      %v1859 = vpop.f32.mrb[0].mxu0
      %1860 = vmatprep.mubr.bf16.mxu0 0
      %1861 = vmatmul.mubr.bf16.gmra.mrb[0].mxu0 %v790
      %v1862 = vpop.f32.mrb[0].mxu0
      %v1863 = vadd.f32 %v1702, %v1862
      %v1864 = vpop.f32.mrb[0].mxu0
      %v1865 = vpop.f32.mrb[0].mxu0
      %v1866 = vadd.f32 %v1705, %v1865
      %v1867 = vpop.f32.mrb[0].mxu0
      %1868 = vmatprep.mubr.bf16.mxu0 0
      %1869 = vmatmul.mubr.bf16.gmra.mrb[0].mxu0 %v797
      %v1870 = vpop.f32.mrb[0].mxu0
      %v1871 = vadd.f32 %v1710, %v1870
      %v1872 = vpop.f32.mrb[0].mxu0
      %v1873 = vpop.f32.mrb[0].mxu0
      %v1874 = vadd.f32 %v1713, %v1873
      %v1875 = vpop.f32.mrb[0].mxu0
      %1876 = vmatprep.mubr.bf16.mxu0 0
      %1877 = vmatmul.mubr.bf16.gmra.mrb[0].mxu0 %v804
      %v1878 = vpop.f32.mrb[0].mxu0
      %v1879 = vadd.f32 %v1718, %v1878
      %v1880 = vpop.f32.mrb[0].mxu0
      %v1881 = vpop.f32.mrb[0].mxu0
      %v1882 = vadd.f32 %v1721, %v1881
      %v1883 = vpop.f32.mrb[0].mxu0
      %1884 = vmatprep.mubr.bf16.mxu0 0
      %1885 = vmatmul.mubr.bf16.gmra.mrb[0].mxu0 %v811
      %v1886 = vpop.f32.mrb[0].mxu0
      %v1887 = vadd.f32 %v1726, %v1886
      %v1888 = vpop.f32.mrb[0].mxu0
      %v1889 = vpop.f32.mrb[0].mxu0
      %v1890 = vadd.f32 %v1729, %v1889
      %v1891 = vpop.f32.mrb[0].mxu0
      %1892 = vmatprep.mubr.bf16.mxu0 0
      %1893 = vmatmul.mubr.bf16.gmra.mrb[0].mxu0 %v818
      %v1894 = vpop.f32.mrb[0].mxu0
      %v1895 = vadd.f32 %v1734, %v1894
      %v1896 = vpop.f32.mrb[0].mxu0
      %v1897 = vpop.f32.mrb[0].mxu0
      %v1898 = vadd.f32 %v1737, %v1897
      %v1899 = vpop.f32.mrb[0].mxu0
      %1900 = vmatprep.mubr.bf16.mxu0 0
      %1901 = vmatmul.mubr.bf16.gmra.mrb[0].mxu0 %v825
      %v1902 = vpop.f32.mrb[0].mxu0
      %v1903 = vadd.f32 %v1742, %v1902
      %v1904 = vpop.f32.mrb[0].mxu0
      %v1905 = vpop.f32.mrb[0].mxu0
      %v1906 = vadd.f32 %v1745, %v1905
      %v1907 = vpop.f32.mrb[0].mxu0
      %1908 = vmatprep.mubr.bf16.mxu0 0
      %1909 = vmatmul.mubr.bf16.gmra.mrb[0].mxu0 %v832
      %v1910 = vpop.f32.mrb[0].mxu0
      %v1911 = vadd.f32 %v1750, %v1910
      %v1912 = vpop.f32.mrb[0].mxu0
      %v1913 = vpop.f32.mrb[0].mxu0
      %v1914 = vadd.f32 %v1753, %v1913
      %v1915 = vpop.f32.mrb[0].mxu0
      %1916 = vmatprep.mubr.bf16.mxu0 0
      %1917 = vmatmul.mubr.bf16.gmra.mrb[0].mxu0 %v839
      %v1918 = vpop.f32.mrb[0].mxu0
      %v1919 = vadd.f32 %v1758, %v1918
      %v1920 = vpop.f32.mrb[0].mxu0
      %v1921 = vpop.f32.mrb[0].mxu0
      %v1922 = vadd.f32 %v1761, %v1921
      %v1923 = vpop.f32.mrb[0].mxu0
      %1924 = vmatprep.mubr.bf16.mxu0 0
      %1925 = vmatmul.mubr.bf16.gmra.mrb[0].mxu0 %v846
      %v1926 = vpop.f32.mrb[0].mxu0
      %v1927 = vadd.f32 %v1766, %v1926
      %v1928 = vpop.f32.mrb[0].mxu0
      %v1929 = vpop.f32.mrb[0].mxu0
      %v1930 = vadd.f32 %v1769, %v1929
      %v1931 = vpop.f32.mrb[0].mxu0
      %1932 = vmatprep.mubr.bf16.mxu0 0
      %1933 = vmatmul.mubr.bf16.gmra.mrb[0].mxu0 %v853
      %v1934 = vpop.f32.mrb[0].mxu0
      %v1935 = vadd.f32 %v1774, %v1934
      %v1936 = vpop.f32.mrb[0].mxu0
      %v1937 = vpop.f32.mrb[0].mxu0
      %v1938 = vadd.f32 %v1777, %v1937
      %v1939 = vpop.f32.mrb[0].mxu0
      %1940 = vmatprep.mubr.bf16.mxu0 0
      %1941 = vmatmul.mubr.bf16.gmra.mrb[0].mxu0 %v860
      %v1942 = vpop.f32.mrb[0].mxu0
      %v1943 = vadd.f32 %v1782, %v1942
      %v1944 = vpop.f32.mrb[0].mxu0
      %v1945 = vpop.f32.mrb[0].mxu0
      %v1946 = vadd.f32 %v1785, %v1945
      %v1947 = vpop.f32.mrb[0].mxu0
      %1948 = vmatprep.mubr.bf16.mxu0 0
      %1949 = vmatmul.mubr.bf16.gmra.mrb[0].mxu0 %v867
      %v1950 = vpop.f32.mrb[0].mxu0
      %v1951 = vadd.f32 %v1790, %v1950
      %v1952 = vpop.f32.mrb[0].mxu0
      %v1953 = vpop.f32.mrb[0].mxu0
      %v1954 = vadd.f32 %v1793, %v1953
      %v1955 = vpop.f32.mrb[0].mxu0
      %1956 = vmatprep.mubr.bf16.mxu0 0
      %1957 = vmatmul.mubr.bf16.gmra.mrb[0].mxu0 %v874
      %v1958 = vpop.f32.mrb[0].mxu0
      %v1959 = vadd.f32 %v1798, %v1958
      %v1960 = vpop.f32.mrb[0].mxu0
      %v1961 = vpop.f32.mrb[0].mxu0
      %v1962 = vadd.f32 %v1801, %v1961
      %v1963 = vpop.f32.mrb[0].mxu0
      %1964 = vmatprep.mubr.bf16.mxu0 0
      %1965 = vmatmul.mubr.bf16.gmra.mrb[0].mxu0 %v881
      %v1966 = vpop.f32.mrb[0].mxu0
      %v1967 = vadd.f32 %v1806, %v1966
      %v1968 = vpop.f32.mrb[0].mxu0
      %v1969 = vpop.f32.mrb[0].mxu0
      %v1970 = vadd.f32 %v1809, %v1969
      %v1971 = vpop.f32.mrb[0].mxu0
      %1972 = vmatprep.mubr.bf16.mxu0 0
      %1973 = vmatmul.mubr.bf16.gmra.mrb[0].mxu0 %v888
      %v1974 = vpop.f32.mrb[0].mxu0
      %v1975 = vadd.f32 %v1814, %v1974
      %v1976 = vpop.f32.mrb[0].mxu0
      %v1977 = vpop.f32.mrb[0].mxu0
      %v1978 = vadd.f32 %v1817, %v1977
      %v1979 = vpop.f32.mrb[0].mxu0
      %1980 = vdwg.mxu0
      %1981 = vst [vmem:[%s175] sm:$0xff] %v1855
      %1982 = vst [vmem:[%s175 + $0x8] sm:$0xff] %v1858
      %1983 = vst [vmem:[%s175 + $0x10] sm:$0xff] %v1863
      %1984 = vst [vmem:[%s175 + $0x18] sm:$0xff] %v1866
      %1985 = vst [vmem:[%s175 + $0x20] sm:$0xff] %v1871
      %1986 = vst [vmem:[%s175 + $0x28] sm:$0xff] %v1874
      %1987 = vst [vmem:[%s175 + $0x30] sm:$0xff] %v1879
      %1988 = vst [vmem:[%s175 + $0x38] sm:$0xff] %v1882
      %1989 = vst [vmem:[%s175 + $0x40] sm:$0xff] %v1887
      %1990 = vst [vmem:[%s175 + $0x48] sm:$0xff] %v1890
      %1991 = vst [vmem:[%s175 + $0x50] sm:$0xff] %v1895
      %1992 = vst [vmem:[%s175 + $0x58] sm:$0xff] %v1898
      %1993 = vst [vmem:[%s175 + $0x60] sm:$0xff] %v1903
      %1994 = vst [vmem:[%s175 + $0x68] sm:$0xff] %v1906
      %1995 = vst [vmem:[%s175 + $0x70] sm:$0xff] %v1911
      %1996 = vst [vmem:[%s175 + $0x78] sm:$0xff] %v1914
      %1997 = vst [vmem:[%s175 + $0x80] sm:$0xff] %v1919
      %1998 = vst [vmem:[%s175 + $0x88] sm:$0xff] %v1922
      %1999 = vst [vmem:[%s175 + $0x90] sm:$0xff] %v1927
      %2000 = vst [vmem:[%s175 + $0x98] sm:$0xff] %v1930
      %2001 = vst [vmem:[%s175 + $0xa0] sm:$0xff] %v1935
      %2002 = vst [vmem:[%s175 + $0xa8] sm:$0xff] %v1938
      %2003 = vst [vmem:[%s175 + $0xb0] sm:$0xff] %v1943
      %2004 = vst [vmem:[%s175 + $0xb8] sm:$0xff] %v1946
      %2005 = vst [vmem:[%s175 + $0xc0] sm:$0xff] %v1951
      %2006 = vst [vmem:[%s175 + $0xc8] sm:$0xff] %v1954
      %2007 = vst [vmem:[%s175 + $0xd0] sm:$0xff] %v1959
      %2008 = vst [vmem:[%s175 + $0xd8] sm:$0xff] %v1962
      %2009 = vst [vmem:[%s175 + $0xe0] sm:$0xff] %v1967
      %2010 = vst [vmem:[%s175 + $0xe8] sm:$0xff] %v1970
      %2011 = vst [vmem:[%s175 + $0xf0] sm:$0xff] %v1975
      %2012 = vst [vmem:[%s175 + $0xf8] sm:$0xff] %v1978
      %s2013 = smul.u32 32, %s14
      %p2014 = scmp.lt.s32.totalorder %s2013, 63
      %s2015 = scalar_select %p2014, %s2013, 63
      %s2016 = smul.addr %s2015, 8
      %s2017 = scalar_lea.vmem %s3, %s2016
      // Predicated region
      $region33: #{deepnet_forward.1} parent=31 // pred_check
        %p2018 = pneg %p100
      $region34: #{deepnet_forward.1} parent=31 // pred_check_branch
        %2020 = sbr.rel (%p2018) target = $region36
      $region35: #{deepnet_forward.1} parent=31 // pred_region
        %s2021 = smul.u32 32, %s14
      $region36: #{deepnet_forward.1} parent=31 // pred_fallthru
        _
    $region32: #{deepnet_forward.1} parent=5 // pred_fallthru
      _
    %p2022 = scmp.le.s32.totalorder 2, %s9
    // Predicated region
    $region37: #{deepnet_forward.1} parent=5 // pred_check
      %p2023 = pneg %p2022
    $region38: #{deepnet_forward.1} parent=5 // pred_check_branch
      %2025 = sbr.rel (%p2023) target = $region40
    $region39: #{deepnet_forward.1} parent=5 // pred_region
      %s2026 = ssub.s32 %s9, 2
      // Predicated region
      $region41: #{deepnet_forward.1} parent=39 // pred_check
        %p2027 = pneg %p106
      $region42: #{deepnet_forward.1} parent=39 // pred_check_branch
        %2029 = sbr.rel (%p2027) target = $region44
      $region43: #{deepnet_forward.1} parent=39 // pred_region
        %s2030 = smul.u32 32, %s15
        %p2031 = scmp.lt.s32.totalorder %s2030, 63
        %s2032 = scalar_select %p2031, %s2030, 63
        %s2033 = smul.addr %s2032, 8
        %s2034 = scalar_lea.vmem %s3, %s2033
      $region44: #{deepnet_forward.1} parent=39 // pred_fallthru
        _
    $region40: #{deepnet_forward.1} parent=5 // pred_fallthru
      _
  $region6: #{deepnet_forward.1} parent=0 // loop_footer
    %s13 = sadd.s32 1, %s9
  $region7: #{deepnet_forward.1} parent=0 // loop_footer_branch
    %8 = sbr.rel target = $region3
  $region8: #{deepnet_forward.1} parent=0 // loop_exit
    _

</llo_original>
